<compile_context>
chip_gen: v6e
topology: v6e:2x2x1
jax: 0.10.0
libtpu: 0.0.40
codegen_flags: <defaults>
</compile_context>

<pallas_src>
import jax
import jax.numpy as jnp
from jax.experimental import pallas as pl
from jax.experimental.pallas import tpu as pltpu

LANE = 128        # lane width for hidden/output layer padding
BGRAN = 16        # batch-tile granule (safe for bf16 sublane packing)
NEG_SLOPE = 0.2


def _round_up(n, m):
    return ((n + m - 1) // m) * m


def _make_mlp_kernel(P, k1, xout):
    """P: padded lane width for hidden layers; k1: sublane-padded z_size;
    xout: real output width (narrow, masked final store)."""

    def kernel(x_ref, w_ref, b_ref, o_ref):
        # ---- layer 1: Linear(z_size -> hs1) + LeakyReLU(0.2). K = k1 (<= P).
        h = jnp.dot(x_ref[...], w_ref[0:k1, :],
                    preferred_element_type=jnp.float32)
        h = h + b_ref[0:1, :]
        h = jnp.where(h > 0, h, NEG_SLOPE * h).astype(jnp.bfloat16)
        # ---- layers 2, 3: Linear + LeakyReLU(0.2). Padded lanes stay exactly 0.
        for li in (1, 2):
            w = w_ref[li * P:(li + 1) * P, :]
            h = jnp.dot(h, w, preferred_element_type=jnp.float32)
            h = h + b_ref[li:li + 1, :]
            h = jnp.where(h > 0, h, NEG_SLOPE * h).astype(jnp.bfloat16)
        # ---- output layer: Linear + Tanh; only the first `xout` lanes are real.
        out = jnp.dot(h, w_ref[3 * P:4 * P, :],
                      preferred_element_type=jnp.float32) + b_ref[3:4, :]
        o_ref[...] = jnp.tanh(out[:, :xout]).astype(o_ref.dtype)

    return kernel


def pack_adversary_params(params):
    """Pack the 4 Linear layers into one bf16 weight slab + one f32 bias slab.

    params: {'lin1'|'lin2'|'lin3'|'output': (w [in, out], b [out])}  (w is the
    transpose of PyTorch's nn.Linear weight so the kernel computes z @ W + b).
    Do this ONCE at parameter-init time; it is not part of the hot path.
    """
    layers = [params["lin1"], params["lin2"], params["lin3"], params["output"]]
    dims = [layers[0][0].shape[0]] + [w.shape[1] for w, _ in layers]
    P = max(_round_up(int(d), LANE) for d in dims)   # common padded lane width
    k1 = _round_up(int(dims[0]), 8)                  # layer-1 contraction width

    w_slab = jnp.zeros((4 * P, P), jnp.bfloat16)
    b_slab = jnp.zeros((8, P), jnp.float32)          # rows 4..7 unused padding
    for i, (w, b) in enumerate(layers):
        din, dout = w.shape
        w_slab = w_slab.at[i * P:i * P + din, :dout].set(w.astype(jnp.bfloat16))
        b_slab = b_slab.at[i, :dout].set(b.reshape(-1).astype(jnp.float32))
    return dict(w_slab=w_slab, b_slab=b_slab,
                dims=tuple(int(d) for d in dims), P=P, k1=k1)


def make_adversary_forward(packed, *, tile_b=2048):
    """Returns a jitted forward(z) using pre-packed parameters."""
    P, k1, dims = packed["P"], packed["k1"], packed["dims"]
    z_size, xout = dims[0], dims[-1]
    w_slab, b_slab = packed["w_slab"], packed["b_slab"]
    kernel = _make_mlp_kernel(P, k1, xout)

    @jax.jit
    def forward(z):
        B = z.shape[0]
        # Largest batch tile (multiple of BGRAN) that still leaves >= 2 grid
        # steps when the batch allows: v7x has 2 TensorCores and the "parallel"
        # grid axis is what shards across them.
        pB_g = _round_up(B, BGRAN)
        half = (pB_g // 2 // BGRAN) * BGRAN
        tile = min(_round_up(tile_b, BGRAN), half) if half >= BGRAN else pB_g
        pB = _round_up(pB_g, tile)
        grid = (pB // tile,)

        # bf16 activations: identical operands reach the MXU, half the HBM read.
        zb = z.astype(jnp.bfloat16)
        if pB != B or k1 != z_size:
            zp = jnp.zeros((pB, k1), jnp.bfloat16).at[:B, :z_size].set(zb)
        else:
            zp = zb

        out = pl.pallas_call(
            kernel,
            out_shape=jax.ShapeDtypeStruct((pB, xout), jnp.float32),
            grid=grid,
            in_specs=[
                pl.BlockSpec((tile, k1), lambda i: (i, 0)),   # activations (bf16), tiled
                pl.BlockSpec((4 * P, P), lambda i: (0, 0)),   # weight slab: VMEM-resident
                pl.BlockSpec((8, P), lambda i: (0, 0)),       # bias slab:   VMEM-resident
            ],
            out_specs=pl.BlockSpec((tile, xout), lambda i: (i, 0)),  # narrow f32 writeback
            compiler_params=pltpu.CompilerParams(
                dimension_semantics=("parallel",)),            # shard batch across TCs
        )(zp, w_slab, b_slab)
        return out[:B, :]

    return forward


def init_linear(key, in_features, out_features, dtype=jnp.float32):
    """Deterministic init mimicking nn.Linear default (uniform +-1/sqrt(fan_in)).
    Weight stored as [in_features, out_features]."""
    kw, kb = jax.random.split(key)
    bound = 1.0 / (in_features ** 0.5)
    w = jax.random.uniform(kw, (in_features, out_features), dtype,
                           minval=-bound, maxval=bound)
    b = jax.random.uniform(kb, (out_features,), dtype,
                           minval=-bound, maxval=bound)
    return w, b


def reference_forward_f32(z, params):
    """Pure f32 reference matching the PyTorch module semantics."""
    leaky = lambda v: jnp.where(v > 0, v, NEG_SLOPE * v)
    (w1, b1), (w2, b2) = params["lin1"], params["lin2"]
    (w3, b3), (w4, b4) = params["lin3"], params["output"]
    h = leaky(z @ w1 + b1)
    h = leaky(h @ w2 + b2)
    h = leaky(h @ w3 + b3)
    return jnp.tanh(h @ w4 + b4)


def reference_forward_mixed(z, params):
    """Reference matching the kernel's precision (bf16 operands, f32 acc)."""
    leaky = lambda v: jnp.where(v > 0, v, NEG_SLOPE * v)
    layers = [params["lin1"], params["lin2"], params["lin3"], params["output"]]
    h = z.astype(jnp.float32)
    for li, (w, b) in enumerate(layers):
        h = jnp.dot(h.astype(jnp.bfloat16), w.astype(jnp.bfloat16),
                    preferred_element_type=jnp.float32) + b.astype(jnp.float32)
        h = leaky(h) if li < 3 else jnp.tanh(h)
    return h


if __name__ == "__main__":
    # Small shapes consistent with the module: z_size, hs1, hs2, hs3, xout_size.
    batch = 512
    z_size, hs1, hs2, hs3, xout_size = 32, 64, 48, 32, 10

    key = jax.random.PRNGKey(0)
    kz, k1, k2, k3, k4 = jax.random.split(key, 5)

    z = jax.random.normal(kz, (batch, z_size), jnp.float32)
    params = {
        "lin1": init_linear(k1, z_size, hs1),
        "lin2": init_linear(k2, hs1, hs2),
        "lin3": init_linear(k3, hs2, hs3),
        "output": init_linear(k4, hs3, xout_size),
    }

    packed = pack_adversary_params(params)           # once, outside the hot path
    forward = make_adversary_forward(packed, tile_b=2048)  # grid = (2,) for B=512

    out = forward(z)
    out = jax.block_until_ready(out)
    assert out.shape == (batch, xout_size), out.shape

    ref_mixed = reference_forward_mixed(z, params)
    ref_f32 = reference_forward_f32(z, params)
    # Tight check vs a precision-matched reference, looser vs pure f32.
    assert jnp.allclose(out, ref_mixed, atol=1e-3, rtol=1e-3), (
        "mixed-precision mismatch, max |diff| = "
        f"{float(jnp.max(jnp.abs(out - ref_mixed)))}")
    assert jnp.allclose(out, ref_f32, atol=3e-2, rtol=3e-2), (
        "f32 reference mismatch, max |diff| = "
        f"{float(jnp.max(jnp.abs(out - ref_f32)))}")

    print("KERNEL_OK")
</pallas_src>

<mosaic_0001>
module attributes {stable_mosaic.version = 11 : i64} {
  func.func @kernel(%arg0: i32, %arg1: memref<256x32xbf16, #tpu.memory_space<vmem>>, %arg2: memref<512x128xbf16, #tpu.memory_space<vmem>>, %arg3: memref<8x128xf32, #tpu.memory_space<vmem>>, %arg4: memref<256x10xf32, #tpu.memory_space<vmem>>) attributes {dimension_semantics = [#tpu.dimension_semantics<parallel>], iteration_bounds = array<i64: 2>, scalar_prefetch = 0 : i64, scratch_operands = 0 : i64, tpu.core_type = #tpu.core_type<tc>, window_params = [{transform_indices = @transform_0, window_bounds = array<i64: 256, 32>}, {pipeline_mode = #tpu.pipeline_mode<synchronous>, transform_indices = @transform_1, window_bounds = array<i64: 512, 128>}, {pipeline_mode = #tpu.pipeline_mode<synchronous>, transform_indices = @transform_2, window_bounds = array<i64: 8, 128>}, {transform_indices = @transform_3, window_bounds = array<i64: 256, 10>}]} {
    %c0 = arith.constant 0 : index
    %c0_0 = arith.constant 0 : index
    %0 = vector.load %arg1[%c0, %c0_0] : memref<256x32xbf16, #tpu.memory_space<vmem>>, vector<256x32xbf16>
    %c0_1 = arith.constant 0 : index
    %c0_2 = arith.constant 0 : index
    %1 = vector.load %arg2[%c0_1, %c0_2] : memref<512x128xbf16, #tpu.memory_space<vmem>>, vector<32x128xbf16>
    %cst = arith.constant dense<0.000000e+00> : vector<256x128xf32>
    %2 = tpu.matmul %0, %1, %cst {dimension_numbers = #tpu.dot_dimension_numbers<[1], [0], [0], [1], [0, 0, 1, 1], [], []>} : vector<256x32xbf16>, vector<32x128xbf16>, vector<256x128xf32> -> vector<256x128xf32>
    %c0_3 = arith.constant 0 : index
    %c0_4 = arith.constant 0 : index
    %3 = vector.load %arg3[%c0_3, %c0_4] : memref<8x128xf32, #tpu.memory_space<vmem>>, vector<1x128xf32>
    %4 = vector.broadcast %3 : vector<1x128xf32> to vector<256x128xf32>
    %5 = arith.addf %2, %4 : vector<256x128xf32>
    %cst_5 = arith.constant 0.000000e+00 : f32
    %6 = vector.broadcast %cst_5 : f32 to vector<256x128xf32>
    %7 = arith.cmpf ogt, %5, %6 : vector<256x128xf32>
    %cst_6 = arith.constant 2.000000e-01 : f32
    %8 = vector.broadcast %cst_6 : f32 to vector<256x128xf32>
    %9 = arith.mulf %8, %5 : vector<256x128xf32>
    %10 = arith.select %7, %5, %9 : vector<256x128xi1>, vector<256x128xf32>
    %11 = arith.truncf %10 : vector<256x128xf32> to vector<256x128xbf16>
    %c128 = arith.constant 128 : index
    %c0_7 = arith.constant 0 : index
    %12 = vector.load %arg2[%c128, %c0_7] : memref<512x128xbf16, #tpu.memory_space<vmem>>, vector<128x128xbf16>
    %cst_8 = arith.constant dense<0.000000e+00> : vector<256x128xf32>
    %13 = tpu.matmul %11, %12, %cst_8 {dimension_numbers = #tpu.dot_dimension_numbers<[1], [0], [0], [1], [0, 0, 1, 1], [], []>} : vector<256x128xbf16>, vector<128x128xbf16>, vector<256x128xf32> -> vector<256x128xf32>
    %c1 = arith.constant 1 : index
    %c0_9 = arith.constant 0 : index
    %14 = vector.load %arg3[%c1, %c0_9] : memref<8x128xf32, #tpu.memory_space<vmem>>, vector<1x128xf32>
    %15 = vector.broadcast %14 : vector<1x128xf32> to vector<256x128xf32>
    %16 = arith.addf %13, %15 : vector<256x128xf32>
    %cst_10 = arith.constant 0.000000e+00 : f32
    %17 = vector.broadcast %cst_10 : f32 to vector<256x128xf32>
    %18 = arith.cmpf ogt, %16, %17 : vector<256x128xf32>
    %cst_11 = arith.constant 2.000000e-01 : f32
    %19 = vector.broadcast %cst_11 : f32 to vector<256x128xf32>
    %20 = arith.mulf %19, %16 : vector<256x128xf32>
    %21 = arith.select %18, %16, %20 : vector<256x128xi1>, vector<256x128xf32>
    %22 = arith.truncf %21 : vector<256x128xf32> to vector<256x128xbf16>
    %c256 = arith.constant 256 : index
    %c0_12 = arith.constant 0 : index
    %23 = vector.load %arg2[%c256, %c0_12] : memref<512x128xbf16, #tpu.memory_space<vmem>>, vector<128x128xbf16>
    %cst_13 = arith.constant dense<0.000000e+00> : vector<256x128xf32>
    %24 = tpu.matmul %22, %23, %cst_13 {dimension_numbers = #tpu.dot_dimension_numbers<[1], [0], [0], [1], [0, 0, 1, 1], [], []>} : vector<256x128xbf16>, vector<128x128xbf16>, vector<256x128xf32> -> vector<256x128xf32>
    %c2 = arith.constant 2 : index
    %c0_14 = arith.constant 0 : index
    %25 = vector.load %arg3[%c2, %c0_14] : memref<8x128xf32, #tpu.memory_space<vmem>>, vector<1x128xf32>
    %26 = vector.broadcast %25 : vector<1x128xf32> to vector<256x128xf32>
    %27 = arith.addf %24, %26 : vector<256x128xf32>
    %cst_15 = arith.constant 0.000000e+00 : f32
    %28 = vector.broadcast %cst_15 : f32 to vector<256x128xf32>
    %29 = arith.cmpf ogt, %27, %28 : vector<256x128xf32>
    %cst_16 = arith.constant 2.000000e-01 : f32
    %30 = vector.broadcast %cst_16 : f32 to vector<256x128xf32>
    %31 = arith.mulf %30, %27 : vector<256x128xf32>
    %32 = arith.select %29, %27, %31 : vector<256x128xi1>, vector<256x128xf32>
    %33 = arith.truncf %32 : vector<256x128xf32> to vector<256x128xbf16>
    %c384 = arith.constant 384 : index
    %c0_17 = arith.constant 0 : index
    %34 = vector.load %arg2[%c384, %c0_17] : memref<512x128xbf16, #tpu.memory_space<vmem>>, vector<128x128xbf16>
    %cst_18 = arith.constant dense<0.000000e+00> : vector<256x128xf32>
    %35 = tpu.matmul %33, %34, %cst_18 {dimension_numbers = #tpu.dot_dimension_numbers<[1], [0], [0], [1], [0, 0, 1, 1], [], []>} : vector<256x128xbf16>, vector<128x128xbf16>, vector<256x128xf32> -> vector<256x128xf32>
    %c3 = arith.constant 3 : index
    %c0_19 = arith.constant 0 : index
    %36 = vector.load %arg3[%c3, %c0_19] : memref<8x128xf32, #tpu.memory_space<vmem>>, vector<1x128xf32>
    %37 = vector.broadcast %36 : vector<1x128xf32> to vector<256x128xf32>
    %38 = arith.addf %35, %37 : vector<256x128xf32>
    %39 = vector.extract_strided_slice %38 {offsets = [0, 0], sizes = [256, 10], strides = [1, 1]} : vector<256x128xf32> to vector<256x10xf32>
    %40 = math.tanh %39 : vector<256x10xf32>
    %c0_20 = arith.constant 0 : index
    %c0_21 = arith.constant 0 : index
    %41 = vector.load %arg4[%c0_20, %c0_21] : memref<256x10xf32, #tpu.memory_space<vmem>>, vector<256x10xf32>
    tpu.vector_store %arg4[%c0_20, %c0_21], %40 {strides = array<i32>} : memref<256x10xf32, #tpu.memory_space<vmem>>, vector<256x10xf32>,
    return
  }
  func.func @transform_0(%arg0: i32) -> (i32, i32) {
    %c0_i32 = arith.constant 0 : i32
    %c0_i32_0 = arith.constant 0 : i32
    return %arg0, %c0_i32 : i32, i32
  }
  func.func @transform_1(%arg0: i32) -> (i32, i32) {
    %c0_i32 = arith.constant 0 : i32
    %c0_i32_0 = arith.constant 0 : i32
    %c0_i32_1 = arith.constant 0 : i32
    return %c0_i32, %c0_i32_0 : i32, i32
  }
  func.func @transform_2(%arg0: i32) -> (i32, i32) {
    %c0_i32 = arith.constant 0 : i32
    %c0_i32_0 = arith.constant 0 : i32
    %c0_i32_1 = arith.constant 0 : i32
    return %c0_i32, %c0_i32_0 : i32, i32
  }
  func.func @transform_3(%arg0: i32) -> (i32, i32) {
    %c0_i32 = arith.constant 0 : i32
    %c0_i32_0 = arith.constant 0 : i32
    return %arg0, %c0_i32 : i32, i32
  }
}

</mosaic_0001>

<llo_original>
// kernel: forward.1
$region0: #{forward.1}
  #allocation0 [shape = 'u32[]', space=smem, size = 0x4, offset = 0x4, fixed_abs, tag = 'smem constant byte address 0x4 - core index']
  #allocation1 [shape = 'u32[144,128]{1,0:T(1,128)}', space=vmem, size = 0x12000, scoped, tag = 'internal scratch']
  %s0 = inlined_call_operand.vmem [shape: bf16[512,32], index: 0, kind: input, shape index: {}]
  %s1 = inlined_call_operand.vmem [shape: bf16[512,128], index: 1, kind: input, shape index: {}]
  %s2 = inlined_call_operand.vmem [shape: f32[8,128], index: 2, kind: input, shape index: {}]
  %s3 = inlined_call_operand.vmem [shape: f32[512,10], index: 3, kind: output, shape index: {}]
  %s4 = sld [smem:[#allocation0]]
  $region45: #{forward.1} parent=0
    _
  %s6 = ssub.s32 1, %s4
  %s7 = scalar_select 0, %s6, %s4
  loop: start=0, step=1, limit=4
  $region2: #{forward.1} parent=0 // loop_pre_header
    _
  $region3: #{forward.1} parent=0 // loop_header
    %s9 = sphi 0, %s13
    %p10 = scmp.ge.s32.totalorder %s9, 4
    %s19 = sphi 0, %s21
    %s22 = sphi 0, %s19
    %s23 = sphi 0, %s22
    %s39 = sphi 0, %s23
    %s43 = sphi 0, %s43
    %s45 = sphi 0, %s43
    %s46 = sphi 0, %s45
    %s60 = sphi 0, %s46
    %s64 = sphi 0, %s64
    %s66 = sphi 0, %s64
    %s67 = sphi 0, %s66
    %s81 = sphi 0, %s67
    %s87 = sphi 0, %s89
    %s90 = sphi 0, %s87
    %s91 = sphi 0, %s90
    %s107 = sphi 0, %s91
  $region4: #{forward.1} parent=0 // loop_header_branch
    %12 = sbr.rel (%p10) target = $region8
  $region5: #{forward.1} parent=0 // loop_body
    %s14 = ssub.s32 %s9, 1
    %s15 = ssub.s32 %s9, 2
    %s16 = sadd.s32 %s9, 1
    %s17 = ssub.s32 %s9, %s16
    %p18 = scmp.eq.s32.totalorder %s17, 0
    %s20 = sadd.s32 %s19, 1
    %s21 = scalar_select %p18, %s19, %s20
    %p24 = pneg %p18
    %p25 = scmp.eq.s32.totalorder %s9, 1
    %p26 = por %p24, %p25
    %p27 = scmp.ne.s32.totalorder %s19, %s22
    %p28 = scmp.eq.s32.totalorder %s9, 0
    %p29 = por %p27, %p28
    %p30 = scmp.ne.s32.totalorder %s19, %s22
    %p31 = scmp.eq.s32.totalorder %s14, 1
    %p32 = por %p30, %p31
    %p33 = scmp.ne.s32.totalorder %s22, %s23
    %p34 = scmp.eq.s32.totalorder %s14, 0
    %p35 = por %p33, %p34
    %p36 = scmp.ne.s32.totalorder %s22, %s23
    %p37 = scmp.eq.s32.totalorder %s15, 1
    %p38 = por %p36, %p37
    %p40 = scmp.ne.s32.totalorder %s23, %s39
    %p41 = scmp.eq.s32.totalorder %s15, 0
    %p42 = por %p40, %p41
    %s44 = sadd.s32 %s43, 1
    %p47 = scmp.eq.s32.totalorder %s9, 1
    %p48 = scmp.ne.s32.totalorder %s43, %s45
    %p49 = scmp.eq.s32.totalorder %s9, 0
    %p50 = por %p48, %p49
    %p51 = scmp.ne.s32.totalorder %s43, %s45
    %p52 = scmp.eq.s32.totalorder %s14, 1
    %p53 = por %p51, %p52
    %p54 = scmp.ne.s32.totalorder %s45, %s46
    %p55 = scmp.eq.s32.totalorder %s14, 0
    %p56 = por %p54, %p55
    %p57 = scmp.ne.s32.totalorder %s45, %s46
    %p58 = scmp.eq.s32.totalorder %s15, 1
    %p59 = por %p57, %p58
    %p61 = scmp.ne.s32.totalorder %s46, %s60
    %p62 = scmp.eq.s32.totalorder %s15, 0
    %p63 = por %p61, %p62
    %s65 = sadd.s32 %s64, 1
    %p68 = scmp.eq.s32.totalorder %s9, 1
    %p69 = scmp.ne.s32.totalorder %s64, %s66
    %p70 = scmp.eq.s32.totalorder %s9, 0
    %p71 = por %p69, %p70
    %p72 = scmp.ne.s32.totalorder %s64, %s66
    %p73 = scmp.eq.s32.totalorder %s14, 1
    %p74 = por %p72, %p73
    %p75 = scmp.ne.s32.totalorder %s66, %s67
    %p76 = scmp.eq.s32.totalorder %s14, 0
    %p77 = por %p75, %p76
    %p78 = scmp.ne.s32.totalorder %s66, %s67
    %p79 = scmp.eq.s32.totalorder %s15, 1
    %p80 = por %p78, %p79
    %p82 = scmp.ne.s32.totalorder %s67, %s81
    %p83 = scmp.eq.s32.totalorder %s15, 0
    %p84 = por %p82, %p83
    %s85 = ssub.s32 %s9, %s16
    %p86 = scmp.eq.s32.totalorder %s85, 0
    %s88 = sadd.s32 %s87, 1
    %s89 = scalar_select %p86, %s87, %s88
    %p92 = pneg %p86
    %p93 = scmp.eq.s32.totalorder %s9, 1
    %p94 = por %p92, %p93
    %p95 = scmp.ne.s32.totalorder %s87, %s90
    %p96 = scmp.eq.s32.totalorder %s9, 0
    %p97 = por %p95, %p96
    %p98 = scmp.ne.s32.totalorder %s87, %s90
    %p99 = scmp.eq.s32.totalorder %s14, 1
    %p100 = por %p98, %p99
    %p101 = scmp.ne.s32.totalorder %s90, %s91
    %p102 = scmp.eq.s32.totalorder %s14, 0
    %p103 = por %p101, %p102
    %p104 = scmp.ne.s32.totalorder %s90, %s91
    %p105 = scmp.eq.s32.totalorder %s15, 1
    %p106 = por %p104, %p105
    %p108 = scmp.ne.s32.totalorder %s91, %s107
    %p109 = scmp.eq.s32.totalorder %s15, 0
    %p110 = por %p108, %p109
    %p111 = scmp.le.s32.totalorder 1, %s9
    %p112 = scmp.lt.s32.totalorder %s9, 3
    %p113 = pnand %p111, %p112
    %p114 = pneg %p113
    // Predicated region
    $region9: #{forward.1} parent=5 // pred_check
      _
    $region10: #{forward.1} parent=5 // pred_check_branch
      %116 = sbr.rel (%p113) target = $region12
    $region11: #{forward.1} parent=5 // pred_region
      %s117 = ssub.s32 %s9, 1
      // Predicated region
      $region13: #{forward.1} parent=11 // pred_check
        %p118 = pneg %p56
      $region14: #{forward.1} parent=11 // pred_check_branch
        %120 = sbr.rel (%p118) target = $region16
      $region15: #{forward.1} parent=11 // pred_region
        _
      $region16: #{forward.1} parent=11 // pred_fallthru
        _
      // Predicated region
      $region17: #{forward.1} parent=11 // pred_check
        %p121 = pneg %p77
      $region18: #{forward.1} parent=11 // pred_check_branch
        %123 = sbr.rel (%p121) target = $region20
      $region19: #{forward.1} parent=11 // pred_region
        _
      $region20: #{forward.1} parent=11 // pred_fallthru
        _
    $region12: #{forward.1} parent=5 // pred_fallthru
      _
    %p124 = scmp.lt.s32.totalorder %s9, 2
    // Predicated region
    $region21: #{forward.1} parent=5 // pred_check
      %p125 = pneg %p124
    $region22: #{forward.1} parent=5 // pred_check_branch
      %127 = sbr.rel (%p125) target = $region24
    $region23: #{forward.1} parent=5 // pred_region
      // Predicated region
      $region25: #{forward.1} parent=23 // pred_check
        %p128 = pneg %p29
      $region26: #{forward.1} parent=23 // pred_check_branch
        %130 = sbr.rel (%p128) target = $region28
      $region27: #{forward.1} parent=23 // pred_region
        %s131 = smul.u32 32, %s9
        %p132 = scmp.lt.s32.totalorder %s131, 63
        %s133 = scalar_select %p132, %s131, 63
        %s134 = smul.addr %s133, 4
        %s135 = scalar_lea.vmem %s0, %s134
        %s136 = smul.u32 32, %s9
      $region28: #{forward.1} parent=23 // pred_fallthru
        _
    $region24: #{forward.1} parent=5 // pred_fallthru
      _
    %p137 = scmp.le.s32.totalorder 1, %s9
    %p138 = scmp.lt.s32.totalorder %s9, 3
    %p139 = pnand %p137, %p138
    %p140 = pneg %p139
    // Predicated region
    $region29: #{forward.1} parent=5 // pred_check
      _
    $region30: #{forward.1} parent=5 // pred_check_branch
      %142 = sbr.rel (%p139) target = $region32
    $region31: #{forward.1} parent=5 // pred_region
      %s143 = ssub.s32 %s9, 1
      %s144 = smul.u32 32, %s14
      %p145 = scmp.lt.s32.totalorder %s144, 63
      %s146 = scalar_select %p145, %s144, 63
      %s147 = smul.addr %s146, 4
      %s148 = scalar_lea.vmem %s0, %s147
      %p149 = pneg %p35
      %p150 = pneg %p32
      %p151 = pneg %p56
      %p152 = pneg %p53
      %p153 = pneg %p77
      %p154 = pneg %p74
      %p155 = pneg %p103
      %p156 = pneg %p100
      %s157 = smul.u32 32, %s14
      %p158 = scmp.lt.s32.totalorder %s157, 63
      %s159 = scalar_select %p158, %s157, 63
      %s160 = smul.addr %s159, 8
      %s161 = scalar_lea.vmem %s3, %s160
      %s162 = smul.u32 32, %s14
      %p163 = scmp.lt.s32.totalorder %s162, 63
      %s164 = scalar_select %p163, %s162, 63
      %s165 = smul.addr %s164, 4
      %s166 = scalar_lea.vmem %s0, %s165
      %s167 = smul.u32 32, %s14
      %s168 = smul.u32 32, %s14
      %p169 = scmp.lt.s32.totalorder %s168, 63
      %s170 = scalar_select %p169, %s168, 63
      %s171 = smul.addr %s170, 8
      %s172 = scalar_lea.vmem %s3, %s171
      %s173 = smul.u32 32, %s14
      %v175 = vld [vmem:[%s166] sm:$0xf]
      %v176 = vld [vmem:[%s166 + $0x4] sm:$0xf]
      %v177 = vld [vmem:[%s166 + $0x8] sm:$0xf]
      %v178 = vld [vmem:[%s166 + $0xc] sm:$0xf]
      %v179 = vld [vmem:[%s166 + $0x10] sm:$0xf]
      %v180 = vld [vmem:[%s166 + $0x14] sm:$0xf]
      %v181 = vld [vmem:[%s166 + $0x18] sm:$0xf]
      %v182 = vld [vmem:[%s166 + $0x1c] sm:$0xf]
      %v183 = vld [vmem:[%s166 + $0x20] sm:$0xf]
      %v184 = vld [vmem:[%s166 + $0x24] sm:$0xf]
      %v185 = vld [vmem:[%s166 + $0x28] sm:$0xf]
      %v186 = vld [vmem:[%s166 + $0x2c] sm:$0xf]
      %v187 = vld [vmem:[%s166 + $0x30] sm:$0xf]
      %v188 = vld [vmem:[%s166 + $0x34] sm:$0xf]
      %v189 = vld [vmem:[%s166 + $0x38] sm:$0xf]
      %v190 = vld [vmem:[%s166 + $0x3c] sm:$0xf]
      %v191 = vld [vmem:[%s166 + $0x40] sm:$0xf]
      %v192 = vld [vmem:[%s166 + $0x44] sm:$0xf]
      %v193 = vld [vmem:[%s166 + $0x48] sm:$0xf]
      %v194 = vld [vmem:[%s166 + $0x4c] sm:$0xf]
      %v195 = vld [vmem:[%s166 + $0x50] sm:$0xf]
      %v196 = vld [vmem:[%s166 + $0x54] sm:$0xf]
      %v197 = vld [vmem:[%s166 + $0x58] sm:$0xf]
      %v198 = vld [vmem:[%s166 + $0x5c] sm:$0xf]
      %v199 = vld [vmem:[%s166 + $0x60] sm:$0xf]
      %v200 = vld [vmem:[%s166 + $0x64] sm:$0xf]
      %v201 = vld [vmem:[%s166 + $0x68] sm:$0xf]
      %v202 = vld [vmem:[%s166 + $0x6c] sm:$0xf]
      %v203 = vld [vmem:[%s166 + $0x70] sm:$0xf]
      %v204 = vld [vmem:[%s166 + $0x74] sm:$0xf]
      %v205 = vld [vmem:[%s166 + $0x78] sm:$0xf]
      %v206 = vld [vmem:[%s166 + $0x7c] sm:$0xf]
      %v207 = vld [vmem:[%s1] sm:$0xf]
      %v208 = vld [vmem:[%s1 + $0x4] sm:$0xf]
      %v209 = vld [vmem:[%s1 + $0x8] sm:$0xf]
      %v210 = vld [vmem:[%s1 + $0xc] sm:$0xf]
      %v211 = vld [vmem:[%s2] sm:$0x1]
      %v212 = vlaneseq
      %v213 = vshrl.u32 %v212, 7
      %v214 = vsub.s32 0, %v213
      %v215 = vrot.slane %v211, %v214
      %v248 = vunpack.c.l.b16 %v175
      %v249 = vunpack.c.l.b16 %v176
      %v250 = vunpack.c.l.b16 %v177
      %v251 = vunpack.c.l.b16 %v178
      %v252 = vunpack.c.l.b16 %v179
      %v253 = vunpack.c.l.b16 %v180
      %v254 = vunpack.c.l.b16 %v181
      %v255 = vunpack.c.l.b16 %v182
      %v256 = vunpack.c.l.b16 %v183
      %v257 = vunpack.c.l.b16 %v184
      %v258 = vunpack.c.l.b16 %v185
      %v259 = vunpack.c.l.b16 %v186
      %v260 = vunpack.c.l.b16 %v187
      %v261 = vunpack.c.l.b16 %v188
      %v262 = vunpack.c.l.b16 %v189
      %v263 = vunpack.c.l.b16 %v190
      %v264 = vunpack.c.l.b16 %v191
      %v265 = vunpack.c.l.b16 %v192
      %v266 = vunpack.c.l.b16 %v193
      %v267 = vunpack.c.l.b16 %v194
      %v268 = vunpack.c.l.b16 %v195
      %v269 = vunpack.c.l.b16 %v196
      %v270 = vunpack.c.l.b16 %v197
      %v271 = vunpack.c.l.b16 %v198
      %v272 = vunpack.c.l.b16 %v199
      %v273 = vunpack.c.l.b16 %v200
      %v274 = vunpack.c.l.b16 %v201
      %v275 = vunpack.c.l.b16 %v202
      %v276 = vunpack.c.l.b16 %v203
      %v277 = vunpack.c.l.b16 %v204
      %v278 = vunpack.c.l.b16 %v205
      %v279 = vunpack.c.l.b16 %v206
      %v280 = vpack.c.b16 %v249, %v248
      %v281 = vpack.c.b16 %v251, %v250
      %v282 = vpack.c.b16 %v253, %v252
      %v283 = vpack.c.b16 %v255, %v254
      %v284 = vpack.c.b16 %v257, %v256
      %v285 = vpack.c.b16 %v259, %v258
      %v286 = vpack.c.b16 %v261, %v260
      %v287 = vpack.c.b16 %v263, %v262
      %v288 = vpack.c.b16 %v265, %v264
      %v289 = vpack.c.b16 %v267, %v266
      %v290 = vpack.c.b16 %v269, %v268
      %v291 = vpack.c.b16 %v271, %v270
      %v292 = vpack.c.b16 %v273, %v272
      %v293 = vpack.c.b16 %v275, %v274
      %v294 = vpack.c.b16 %v277, %v276
      %v295 = vpack.c.b16 %v279, %v278
      %v300 = vunpack.c.l.b16 %v207
      %v301 = vunpack.c.l.b16 %v208
      %v302 = vunpack.c.l.b16 %v209
      %v303 = vunpack.c.l.b16 %v210
      %v304 = vpack.c.b16 %v301, %v300
      %v305 = vpack.c.b16 %v303, %v302
      %vm308 = vcmask 261120
      %v310 = vsel %vm308, %v280, 0
      %v313 = vsel %vm308, %v281, 0
      %v316 = vsel %vm308, %v282, 0
      %v319 = vsel %vm308, %v283, 0
      %v322 = vsel %vm308, %v284, 0
      %v325 = vsel %vm308, %v285, 0
      %v328 = vsel %vm308, %v286, 0
      %v331 = vsel %vm308, %v287, 0
      %v334 = vsel %vm308, %v288, 0
      %v337 = vsel %vm308, %v289, 0
      %v340 = vsel %vm308, %v290, 0
      %v343 = vsel %vm308, %v291, 0
      %v346 = vsel %vm308, %v292, 0
      %v349 = vsel %vm308, %v293, 0
      %v352 = vsel %vm308, %v294, 0
      %v355 = vsel %vm308, %v295, 0
      %357 = vmatprep.subr.bf16.mxu0 0
      %358 = vmatpush1.bf16.msra.mxu0 0
      %359 = vmatprep.subr.bf16.mxu0 0
      %360 = vmatpush1.bf16.msra.mxu0 0
      %361 = vmatprep.subr.bf16.mxu0 0
      %362 = vmatpush1.bf16.msra.mxu0 0
      %363 = vmatprep.subr.bf16.mxu0 0
      %364 = vmatpush1.bf16.msra.mxu0 0
      %365 = vmatprep.subr.bf16.mxu0 0
      %366 = vmatpush1.bf16.msra.mxu0 0
      %367 = vmatprep.subr.bf16.mxu0 0
      %368 = vmatpush1.bf16.msra.mxu0 0
      %369 = vmatprep.subr.bf16.mxu0 0
      %370 = vmatpush1.bf16.msra.mxu0 %v305
      %371 = vmatprep.subr.bf16.mxu0 0
      %372 = vmatpush1.bf16.msra.mxu0 %v304
      %373 = vmatprep.subr.bf16.mxu0 0
      %374 = vmatpush2.bf16.msra.mxu0 0
      %375 = vmatprep.subr.bf16.mxu0 0
      %376 = vmatpush2.bf16.msra.mxu0 0
      %377 = vmatprep.subr.bf16.mxu0 0
      %378 = vmatpush2.bf16.msra.mxu0 0
      %379 = vmatprep.subr.bf16.mxu0 0
      %380 = vmatpush2.bf16.msra.mxu0 0
      %381 = vmatprep.subr.bf16.mxu0 0
      %382 = vmatpush2.bf16.msra.mxu0 0
      %383 = vmatprep.subr.bf16.mxu0 0
      %384 = vmatpush2.bf16.msra.mxu0 0
      %385 = vmatprep.subr.bf16.mxu0 0
      %386 = vmatpush2.bf16.msra.mxu0 0
      %387 = vmatprep.subr.bf16.mxu0 0
      %388 = vmatpush2.bf16.msra.mxu0 0
      %389 = vmatprep.mubr.bf16.mxu0 0
      %390 = vmatmul.mubr.bf16.gmra.mxu0 %v310
      %v391 = vpop.f32.mrf.mxu0
      %v392 = vadd.f32 %v215, %v391
      %v393 = vpop.f32.mrf.mxu0
      %v394 = vpop.f32.mrf.mxu0
      %v395 = vadd.f32 %v215, %v394
      %v396 = vpop.f32.mrf.mxu0
      %397 = vmatprep.mubr.bf16.mxu0 0
      %398 = vmatmul.mubr.bf16.gmra.mxu0 %v313
      %v399 = vpop.f32.mrf.mxu0
      %v400 = vadd.f32 %v215, %v399
      %v401 = vpop.f32.mrf.mxu0
      %v402 = vpop.f32.mrf.mxu0
      %v403 = vadd.f32 %v215, %v402
      %v404 = vpop.f32.mrf.mxu0
      %405 = vmatprep.mubr.bf16.mxu0 0
      %406 = vmatmul.mubr.bf16.gmra.mxu0 %v316
      %v407 = vpop.f32.mrf.mxu0
      %v408 = vadd.f32 %v215, %v407
      %v409 = vpop.f32.mrf.mxu0
      %v410 = vpop.f32.mrf.mxu0
      %v411 = vadd.f32 %v215, %v410
      %v412 = vpop.f32.mrf.mxu0
      %413 = vmatprep.mubr.bf16.mxu0 0
      %414 = vmatmul.mubr.bf16.gmra.mxu0 %v319
      %v415 = vpop.f32.mrf.mxu0
      %v416 = vadd.f32 %v215, %v415
      %v417 = vpop.f32.mrf.mxu0
      %v418 = vpop.f32.mrf.mxu0
      %v419 = vadd.f32 %v215, %v418
      %v420 = vpop.f32.mrf.mxu0
      %421 = vmatprep.mubr.bf16.mxu0 0
      %422 = vmatmul.mubr.bf16.gmra.mxu0 %v322
      %v423 = vpop.f32.mrf.mxu0
      %v424 = vadd.f32 %v215, %v423
      %v425 = vpop.f32.mrf.mxu0
      %v426 = vpop.f32.mrf.mxu0
      %v427 = vadd.f32 %v215, %v426
      %v428 = vpop.f32.mrf.mxu0
      %429 = vmatprep.mubr.bf16.mxu0 0
      %430 = vmatmul.mubr.bf16.gmra.mxu0 %v325
      %v431 = vpop.f32.mrf.mxu0
      %v432 = vadd.f32 %v215, %v431
      %v433 = vpop.f32.mrf.mxu0
      %v434 = vpop.f32.mrf.mxu0
      %v435 = vadd.f32 %v215, %v434
      %v436 = vpop.f32.mrf.mxu0
      %437 = vmatprep.mubr.bf16.mxu0 0
      %438 = vmatmul.mubr.bf16.gmra.mxu0 %v328
      %v439 = vpop.f32.mrf.mxu0
      %v440 = vadd.f32 %v215, %v439
      %v441 = vpop.f32.mrf.mxu0
      %v442 = vpop.f32.mrf.mxu0
      %v443 = vadd.f32 %v215, %v442
      %v444 = vpop.f32.mrf.mxu0
      %445 = vmatprep.mubr.bf16.mxu0 0
      %446 = vmatmul.mubr.bf16.gmra.mxu0 %v331
      %v447 = vpop.f32.mrf.mxu0
      %v448 = vadd.f32 %v215, %v447
      %v449 = vpop.f32.mrf.mxu0
      %v450 = vpop.f32.mrf.mxu0
      %v451 = vadd.f32 %v215, %v450
      %v452 = vpop.f32.mrf.mxu0
      %453 = vmatprep.mubr.bf16.mxu0 0
      %454 = vmatmul.mubr.bf16.gmra.mxu0 %v334
      %v455 = vpop.f32.mrf.mxu0
      %v456 = vadd.f32 %v215, %v455
      %v457 = vpop.f32.mrf.mxu0
      %v458 = vpop.f32.mrf.mxu0
      %v459 = vadd.f32 %v215, %v458
      %v460 = vpop.f32.mrf.mxu0
      %461 = vmatprep.mubr.bf16.mxu0 0
      %462 = vmatmul.mubr.bf16.gmra.mxu0 %v337
      %v463 = vpop.f32.mrf.mxu0
      %v464 = vadd.f32 %v215, %v463
      %v465 = vpop.f32.mrf.mxu0
      %v466 = vpop.f32.mrf.mxu0
      %v467 = vadd.f32 %v215, %v466
      %v468 = vpop.f32.mrf.mxu0
      %469 = vmatprep.mubr.bf16.mxu0 0
      %470 = vmatmul.mubr.bf16.gmra.mxu0 %v340
      %v471 = vpop.f32.mrf.mxu0
      %v472 = vadd.f32 %v215, %v471
      %v473 = vpop.f32.mrf.mxu0
      %v474 = vpop.f32.mrf.mxu0
      %v475 = vadd.f32 %v215, %v474
      %v476 = vpop.f32.mrf.mxu0
      %477 = vmatprep.mubr.bf16.mxu0 0
      %478 = vmatmul.mubr.bf16.gmra.mxu0 %v343
      %v479 = vpop.f32.mrf.mxu0
      %v480 = vadd.f32 %v215, %v479
      %v481 = vpop.f32.mrf.mxu0
      %v482 = vpop.f32.mrf.mxu0
      %v483 = vadd.f32 %v215, %v482
      %v484 = vpop.f32.mrf.mxu0
      %485 = vmatprep.mubr.bf16.mxu0 0
      %486 = vmatmul.mubr.bf16.gmra.mxu0 %v346
      %v487 = vpop.f32.mrf.mxu0
      %v488 = vadd.f32 %v215, %v487
      %v489 = vpop.f32.mrf.mxu0
      %v490 = vpop.f32.mrf.mxu0
      %v491 = vadd.f32 %v215, %v490
      %v492 = vpop.f32.mrf.mxu0
      %493 = vmatprep.mubr.bf16.mxu0 0
      %494 = vmatmul.mubr.bf16.gmra.mxu0 %v349
      %v495 = vpop.f32.mrf.mxu0
      %v496 = vadd.f32 %v215, %v495
      %v497 = vpop.f32.mrf.mxu0
      %v498 = vpop.f32.mrf.mxu0
      %v499 = vadd.f32 %v215, %v498
      %v500 = vpop.f32.mrf.mxu0
      %501 = vmatprep.mubr.bf16.mxu0 0
      %502 = vmatmul.mubr.bf16.gmra.mxu0 %v352
      %v503 = vpop.f32.mrf.mxu0
      %v504 = vadd.f32 %v215, %v503
      %v505 = vpop.f32.mrf.mxu0
      %v506 = vpop.f32.mrf.mxu0
      %v507 = vadd.f32 %v215, %v506
      %v508 = vpop.f32.mrf.mxu0
      %509 = vmatprep.mubr.bf16.mxu0 0
      %510 = vmatmul.mubr.bf16.gmra.mxu0 %v355
      %v511 = vpop.f32.mrf.mxu0
      %v512 = vadd.f32 %v215, %v511
      %v513 = vpop.f32.mrf.mxu0
      %v514 = vpop.f32.mrf.mxu0
      %v515 = vadd.f32 %v215, %v514
      %v516 = vpop.f32.mrf.mxu0
      %517 = vdwg.mxu0
      %vm518 = vcmp.gt.f32.partialorder %v392, 0.0
      %vm519 = vcmp.gt.f32.partialorder %v395, 0.0
      %vm520 = vcmp.gt.f32.partialorder %v400, 0.0
      %vm521 = vcmp.gt.f32.partialorder %v403, 0.0
      %vm522 = vcmp.gt.f32.partialorder %v408, 0.0
      %vm523 = vcmp.gt.f32.partialorder %v411, 0.0
      %vm524 = vcmp.gt.f32.partialorder %v416, 0.0
      %vm525 = vcmp.gt.f32.partialorder %v419, 0.0
      %vm526 = vcmp.gt.f32.partialorder %v424, 0.0
      %vm527 = vcmp.gt.f32.partialorder %v427, 0.0
      %vm528 = vcmp.gt.f32.partialorder %v432, 0.0
      %vm529 = vcmp.gt.f32.partialorder %v435, 0.0
      %vm530 = vcmp.gt.f32.partialorder %v440, 0.0
      %vm531 = vcmp.gt.f32.partialorder %v443, 0.0
      %vm532 = vcmp.gt.f32.partialorder %v448, 0.0
      %vm533 = vcmp.gt.f32.partialorder %v451, 0.0
      %vm534 = vcmp.gt.f32.partialorder %v456, 0.0
      %vm535 = vcmp.gt.f32.partialorder %v459, 0.0
      %vm536 = vcmp.gt.f32.partialorder %v464, 0.0
      %vm537 = vcmp.gt.f32.partialorder %v467, 0.0
      %vm538 = vcmp.gt.f32.partialorder %v472, 0.0
      %vm539 = vcmp.gt.f32.partialorder %v475, 0.0
      %vm540 = vcmp.gt.f32.partialorder %v480, 0.0
      %vm541 = vcmp.gt.f32.partialorder %v483, 0.0
      %vm542 = vcmp.gt.f32.partialorder %v488, 0.0
      %vm543 = vcmp.gt.f32.partialorder %v491, 0.0
      %vm544 = vcmp.gt.f32.partialorder %v496, 0.0
      %vm545 = vcmp.gt.f32.partialorder %v499, 0.0
      %vm546 = vcmp.gt.f32.partialorder %v504, 0.0
      %vm547 = vcmp.gt.f32.partialorder %v507, 0.0
      %vm548 = vcmp.gt.f32.partialorder %v512, 0.0
      %vm549 = vcmp.gt.f32.partialorder %v515, 0.0
      %v550 = vmul.f32 %v392, 0.2
      %v551 = vmul.f32 %v395, 0.2
      %v552 = vmul.f32 %v400, 0.2
      %v553 = vmul.f32 %v403, 0.2
      %v554 = vmul.f32 %v408, 0.2
      %v555 = vmul.f32 %v411, 0.2
      %v556 = vmul.f32 %v416, 0.2
      %v557 = vmul.f32 %v419, 0.2
      %v558 = vmul.f32 %v424, 0.2
      %v559 = vmul.f32 %v427, 0.2
      %v560 = vmul.f32 %v432, 0.2
      %v561 = vmul.f32 %v435, 0.2
      %v562 = vmul.f32 %v440, 0.2
      %v563 = vmul.f32 %v443, 0.2
      %v564 = vmul.f32 %v448, 0.2
      %v565 = vmul.f32 %v451, 0.2
      %v566 = vmul.f32 %v456, 0.2
      %v567 = vmul.f32 %v459, 0.2
      %v568 = vmul.f32 %v464, 0.2
      %v569 = vmul.f32 %v467, 0.2
      %v570 = vmul.f32 %v472, 0.2
      %v571 = vmul.f32 %v475, 0.2
      %v572 = vmul.f32 %v480, 0.2
      %v573 = vmul.f32 %v483, 0.2
      %v574 = vmul.f32 %v488, 0.2
      %v575 = vmul.f32 %v491, 0.2
      %v576 = vmul.f32 %v496, 0.2
      %v577 = vmul.f32 %v499, 0.2
      %v578 = vmul.f32 %v504, 0.2
      %v579 = vmul.f32 %v507, 0.2
      %v580 = vmul.f32 %v512, 0.2
      %v581 = vmul.f32 %v515, 0.2
      %v582 = vsel %vm518, %v392, %v550
      %v583 = vsel %vm519, %v395, %v551
      %v584 = vsel %vm520, %v400, %v552
      %v585 = vsel %vm521, %v403, %v553
      %v586 = vsel %vm522, %v408, %v554
      %v587 = vsel %vm523, %v411, %v555
      %v588 = vsel %vm524, %v416, %v556
      %v589 = vsel %vm525, %v419, %v557
      %v590 = vsel %vm526, %v424, %v558
      %v591 = vsel %vm527, %v427, %v559
      %v592 = vsel %vm528, %v432, %v560
      %v593 = vsel %vm529, %v435, %v561
      %v594 = vsel %vm530, %v440, %v562
      %v595 = vsel %vm531, %v443, %v563
      %v596 = vsel %vm532, %v448, %v564
      %v597 = vsel %vm533, %v451, %v565
      %v598 = vsel %vm534, %v456, %v566
      %v599 = vsel %vm535, %v459, %v567
      %v600 = vsel %vm536, %v464, %v568
      %v601 = vsel %vm537, %v467, %v569
      %v602 = vsel %vm538, %v472, %v570
      %v603 = vsel %vm539, %v475, %v571
      %v604 = vsel %vm540, %v480, %v572
      %v605 = vsel %vm541, %v483, %v573
      %v606 = vsel %vm542, %v488, %v574
      %v607 = vsel %vm543, %v491, %v575
      %v608 = vsel %vm544, %v496, %v576
      %v609 = vsel %vm545, %v499, %v577
      %v610 = vsel %vm546, %v504, %v578
      %v611 = vsel %vm547, %v507, %v579
      %v612 = vsel %vm548, %v512, %v580
      %v613 = vsel %vm549, %v515, %v581
      %v614 = vpack.c.bf16 %v583, %v582
      %v615 = vpack.c.bf16 %v585, %v584
      %v616 = vpack.c.bf16 %v587, %v586
      %v617 = vpack.c.bf16 %v589, %v588
      %v618 = vpack.c.bf16 %v591, %v590
      %v619 = vpack.c.bf16 %v593, %v592
      %v620 = vpack.c.bf16 %v595, %v594
      %v621 = vpack.c.bf16 %v597, %v596
      %v622 = vpack.c.bf16 %v599, %v598
      %v623 = vpack.c.bf16 %v601, %v600
      %v624 = vpack.c.bf16 %v603, %v602
      %v625 = vpack.c.bf16 %v605, %v604
      %v626 = vpack.c.bf16 %v607, %v606
      %v627 = vpack.c.bf16 %v609, %v608
      %v628 = vpack.c.bf16 %v611, %v610
      %v629 = vpack.c.bf16 %v613, %v612
      %v630 = vld [vmem:[%s1 + $0x40] sm:$0xf]
      %v631 = vld [vmem:[%s1 + $0x44] sm:$0xf]
      %v632 = vld [vmem:[%s1 + $0x48] sm:$0xf]
      %v633 = vld [vmem:[%s1 + $0x4c] sm:$0xf]
      %v634 = vld [vmem:[%s1 + $0x50] sm:$0xf]
      %v635 = vld [vmem:[%s1 + $0x54] sm:$0xf]
      %v636 = vld [vmem:[%s1 + $0x58] sm:$0xf]
      %v637 = vld [vmem:[%s1 + $0x5c] sm:$0xf]
      %v638 = vld [vmem:[%s1 + $0x60] sm:$0xf]
      %v639 = vld [vmem:[%s1 + $0x64] sm:$0xf]
      %v640 = vld [vmem:[%s1 + $0x68] sm:$0xf]
      %v641 = vld [vmem:[%s1 + $0x6c] sm:$0xf]
      %v642 = vld [vmem:[%s1 + $0x70] sm:$0xf]
      %v643 = vld [vmem:[%s1 + $0x74] sm:$0xf]
      %v644 = vld [vmem:[%s1 + $0x78] sm:$0xf]
      %v645 = vld [vmem:[%s1 + $0x7c] sm:$0xf]
      %v646 = vld [vmem:[%s2 + $0x1] sm:$0x1]
      %v647 = vlaneseq
      %v648 = vshrl.u32 %v647, 7
      %v649 = vsub.s32 0, %v648
      %v650 = vrot.slane %v646, %v649
      %v667 = vunpack.c.l.b16 %v630
      %v668 = vunpack.c.l.b16 %v631
      %v669 = vunpack.c.l.b16 %v632
      %v670 = vunpack.c.l.b16 %v633
      %v671 = vunpack.c.l.b16 %v634
      %v672 = vunpack.c.l.b16 %v635
      %v673 = vunpack.c.l.b16 %v636
      %v674 = vunpack.c.l.b16 %v637
      %v675 = vunpack.c.l.b16 %v638
      %v676 = vunpack.c.l.b16 %v639
      %v677 = vunpack.c.l.b16 %v640
      %v678 = vunpack.c.l.b16 %v641
      %v679 = vunpack.c.l.b16 %v642
      %v680 = vunpack.c.l.b16 %v643
      %v681 = vunpack.c.l.b16 %v644
      %v682 = vunpack.c.l.b16 %v645
      %v683 = vpack.c.b16 %v668, %v667
      %v684 = vpack.c.b16 %v670, %v669
      %v685 = vpack.c.b16 %v672, %v671
      %v686 = vpack.c.b16 %v674, %v673
      %v687 = vpack.c.b16 %v676, %v675
      %v688 = vpack.c.b16 %v678, %v677
      %v689 = vpack.c.b16 %v680, %v679
      %v690 = vpack.c.b16 %v682, %v681
      %699 = vmatprep.subr.bf16.mxu0 0
      %700 = vmatpush1.bf16.msra.mxu0 %v690
      %701 = vmatprep.subr.bf16.mxu0 0
      %702 = vmatpush1.bf16.msra.mxu0 %v689
      %703 = vmatprep.subr.bf16.mxu0 0
      %704 = vmatpush1.bf16.msra.mxu0 %v688
      %705 = vmatprep.subr.bf16.mxu0 0
      %706 = vmatpush1.bf16.msra.mxu0 %v687
      %707 = vmatprep.subr.bf16.mxu0 0
      %708 = vmatpush1.bf16.msra.mxu0 %v686
      %709 = vmatprep.subr.bf16.mxu0 0
      %710 = vmatpush1.bf16.msra.mxu0 %v685
      %711 = vmatprep.subr.bf16.mxu0 0
      %712 = vmatpush1.bf16.msra.mxu0 %v684
      %713 = vmatprep.subr.bf16.mxu0 0
      %714 = vmatpush1.bf16.msra.mxu0 %v683
      %715 = vmatprep.subr.bf16.mxu0 0
      %716 = vmatpush2.bf16.msra.mxu0 0
      %717 = vmatprep.subr.bf16.mxu0 0
      %718 = vmatpush2.bf16.msra.mxu0 0
      %719 = vmatprep.subr.bf16.mxu0 0
      %720 = vmatpush2.bf16.msra.mxu0 0
      %721 = vmatprep.subr.bf16.mxu0 0
      %722 = vmatpush2.bf16.msra.mxu0 0
      %723 = vmatprep.subr.bf16.mxu0 0
      %724 = vmatpush2.bf16.msra.mxu0 0
      %725 = vmatprep.subr.bf16.mxu0 0
      %726 = vmatpush2.bf16.msra.mxu0 0
      %727 = vmatprep.subr.bf16.mxu0 0
      %728 = vmatpush2.bf16.msra.mxu0 0
      %729 = vmatprep.subr.bf16.mxu0 0
      %730 = vmatpush2.bf16.msra.mxu0 0
      %731 = vmatprep.mubr.bf16.mxu0 0
      %732 = vmatmul.mubr.bf16.gmra.mxu0 %v614
      %v733 = vpop.f32.mrf.mxu0
      %v734 = vadd.f32 %v650, %v733
      %v735 = vpop.f32.mrf.mxu0
      %v736 = vpop.f32.mrf.mxu0
      %v737 = vadd.f32 %v650, %v736
      %v738 = vpop.f32.mrf.mxu0
      %739 = vmatprep.mubr.bf16.mxu0 0
      %740 = vmatmul.mubr.bf16.gmra.mxu0 %v615
      %v741 = vpop.f32.mrf.mxu0
      %v742 = vadd.f32 %v650, %v741
      %v743 = vpop.f32.mrf.mxu0
      %v744 = vpop.f32.mrf.mxu0
      %v745 = vadd.f32 %v650, %v744
      %v746 = vpop.f32.mrf.mxu0
      %747 = vmatprep.mubr.bf16.mxu0 0
      %748 = vmatmul.mubr.bf16.gmra.mxu0 %v616
      %v749 = vpop.f32.mrf.mxu0
      %v750 = vadd.f32 %v650, %v749
      %v751 = vpop.f32.mrf.mxu0
      %v752 = vpop.f32.mrf.mxu0
      %v753 = vadd.f32 %v650, %v752
      %v754 = vpop.f32.mrf.mxu0
      %755 = vmatprep.mubr.bf16.mxu0 0
      %756 = vmatmul.mubr.bf16.gmra.mxu0 %v617
      %v757 = vpop.f32.mrf.mxu0
      %v758 = vadd.f32 %v650, %v757
      %v759 = vpop.f32.mrf.mxu0
      %v760 = vpop.f32.mrf.mxu0
      %v761 = vadd.f32 %v650, %v760
      %v762 = vpop.f32.mrf.mxu0
      %763 = vmatprep.mubr.bf16.mxu0 0
      %764 = vmatmul.mubr.bf16.gmra.mxu0 %v618
      %v765 = vpop.f32.mrf.mxu0
      %v766 = vadd.f32 %v650, %v765
      %v767 = vpop.f32.mrf.mxu0
      %v768 = vpop.f32.mrf.mxu0
      %v769 = vadd.f32 %v650, %v768
      %v770 = vpop.f32.mrf.mxu0
      %771 = vmatprep.mubr.bf16.mxu0 0
      %772 = vmatmul.mubr.bf16.gmra.mxu0 %v619
      %v773 = vpop.f32.mrf.mxu0
      %v774 = vadd.f32 %v650, %v773
      %v775 = vpop.f32.mrf.mxu0
      %v776 = vpop.f32.mrf.mxu0
      %v777 = vadd.f32 %v650, %v776
      %v778 = vpop.f32.mrf.mxu0
      %779 = vmatprep.mubr.bf16.mxu0 0
      %780 = vmatmul.mubr.bf16.gmra.mxu0 %v620
      %v781 = vpop.f32.mrf.mxu0
      %v782 = vadd.f32 %v650, %v781
      %v783 = vpop.f32.mrf.mxu0
      %v784 = vpop.f32.mrf.mxu0
      %v785 = vadd.f32 %v650, %v784
      %v786 = vpop.f32.mrf.mxu0
      %787 = vmatprep.mubr.bf16.mxu0 0
      %788 = vmatmul.mubr.bf16.gmra.mxu0 %v621
      %v789 = vpop.f32.mrf.mxu0
      %v790 = vadd.f32 %v650, %v789
      %v791 = vpop.f32.mrf.mxu0
      %v792 = vpop.f32.mrf.mxu0
      %v793 = vadd.f32 %v650, %v792
      %v794 = vpop.f32.mrf.mxu0
      %795 = vmatprep.mubr.bf16.mxu0 0
      %796 = vmatmul.mubr.bf16.gmra.mxu0 %v622
      %v797 = vpop.f32.mrf.mxu0
      %v798 = vadd.f32 %v650, %v797
      %v799 = vpop.f32.mrf.mxu0
      %v800 = vpop.f32.mrf.mxu0
      %v801 = vadd.f32 %v650, %v800
      %v802 = vpop.f32.mrf.mxu0
      %803 = vmatprep.mubr.bf16.mxu0 0
      %804 = vmatmul.mubr.bf16.gmra.mxu0 %v623
      %v805 = vpop.f32.mrf.mxu0
      %v806 = vadd.f32 %v650, %v805
      %v807 = vpop.f32.mrf.mxu0
      %v808 = vpop.f32.mrf.mxu0
      %v809 = vadd.f32 %v650, %v808
      %v810 = vpop.f32.mrf.mxu0
      %811 = vmatprep.mubr.bf16.mxu0 0
      %812 = vmatmul.mubr.bf16.gmra.mxu0 %v624
      %v813 = vpop.f32.mrf.mxu0
      %v814 = vadd.f32 %v650, %v813
      %v815 = vpop.f32.mrf.mxu0
      %v816 = vpop.f32.mrf.mxu0
      %v817 = vadd.f32 %v650, %v816
      %v818 = vpop.f32.mrf.mxu0
      %819 = vmatprep.mubr.bf16.mxu0 0
      %820 = vmatmul.mubr.bf16.gmra.mxu0 %v625
      %v821 = vpop.f32.mrf.mxu0
      %v822 = vadd.f32 %v650, %v821
      %v823 = vpop.f32.mrf.mxu0
      %v824 = vpop.f32.mrf.mxu0
      %v825 = vadd.f32 %v650, %v824
      %v826 = vpop.f32.mrf.mxu0
      %827 = vmatprep.mubr.bf16.mxu0 0
      %828 = vmatmul.mubr.bf16.gmra.mxu0 %v626
      %v829 = vpop.f32.mrf.mxu0
      %v830 = vadd.f32 %v650, %v829
      %v831 = vpop.f32.mrf.mxu0
      %v832 = vpop.f32.mrf.mxu0
      %v833 = vadd.f32 %v650, %v832
      %v834 = vpop.f32.mrf.mxu0
      %835 = vmatprep.mubr.bf16.mxu0 0
      %836 = vmatmul.mubr.bf16.gmra.mxu0 %v627
      %v837 = vpop.f32.mrf.mxu0
      %v838 = vadd.f32 %v650, %v837
      %v839 = vpop.f32.mrf.mxu0
      %v840 = vpop.f32.mrf.mxu0
      %v841 = vadd.f32 %v650, %v840
      %v842 = vpop.f32.mrf.mxu0
      %843 = vmatprep.mubr.bf16.mxu0 0
      %844 = vmatmul.mubr.bf16.gmra.mxu0 %v628
      %v845 = vpop.f32.mrf.mxu0
      %v846 = vadd.f32 %v650, %v845
      %v847 = vpop.f32.mrf.mxu0
      %v848 = vpop.f32.mrf.mxu0
      %v849 = vadd.f32 %v650, %v848
      %v850 = vpop.f32.mrf.mxu0
      %851 = vmatprep.mubr.bf16.mxu0 0
      %852 = vmatmul.mubr.bf16.gmra.mxu0 %v629
      %v853 = vpop.f32.mrf.mxu0
      %v854 = vadd.f32 %v650, %v853
      %v855 = vpop.f32.mrf.mxu0
      %v856 = vpop.f32.mrf.mxu0
      %v857 = vadd.f32 %v650, %v856
      %v858 = vpop.f32.mrf.mxu0
      %859 = vdwg.mxu0
      %vm860 = vcmp.gt.f32.partialorder %v734, 0.0
      %vm861 = vcmp.gt.f32.partialorder %v737, 0.0
      %vm862 = vcmp.gt.f32.partialorder %v742, 0.0
      %vm863 = vcmp.gt.f32.partialorder %v745, 0.0
      %vm864 = vcmp.gt.f32.partialorder %v750, 0.0
      %vm865 = vcmp.gt.f32.partialorder %v753, 0.0
      %vm866 = vcmp.gt.f32.partialorder %v758, 0.0
      %vm867 = vcmp.gt.f32.partialorder %v761, 0.0
      %vm868 = vcmp.gt.f32.partialorder %v766, 0.0
      %vm869 = vcmp.gt.f32.partialorder %v769, 0.0
      %vm870 = vcmp.gt.f32.partialorder %v774, 0.0
      %vm871 = vcmp.gt.f32.partialorder %v777, 0.0
      %vm872 = vcmp.gt.f32.partialorder %v782, 0.0
      %vm873 = vcmp.gt.f32.partialorder %v785, 0.0
      %vm874 = vcmp.gt.f32.partialorder %v790, 0.0
      %vm875 = vcmp.gt.f32.partialorder %v793, 0.0
      %vm876 = vcmp.gt.f32.partialorder %v798, 0.0
      %vm877 = vcmp.gt.f32.partialorder %v801, 0.0
      %vm878 = vcmp.gt.f32.partialorder %v806, 0.0
      %vm879 = vcmp.gt.f32.partialorder %v809, 0.0
      %vm880 = vcmp.gt.f32.partialorder %v814, 0.0
      %vm881 = vcmp.gt.f32.partialorder %v817, 0.0
      %vm882 = vcmp.gt.f32.partialorder %v822, 0.0
      %vm883 = vcmp.gt.f32.partialorder %v825, 0.0
      %vm884 = vcmp.gt.f32.partialorder %v830, 0.0
      %vm885 = vcmp.gt.f32.partialorder %v833, 0.0
      %vm886 = vcmp.gt.f32.partialorder %v838, 0.0
      %vm887 = vcmp.gt.f32.partialorder %v841, 0.0
      %vm888 = vcmp.gt.f32.partialorder %v846, 0.0
      %vm889 = vcmp.gt.f32.partialorder %v849, 0.0
      %vm890 = vcmp.gt.f32.partialorder %v854, 0.0
      %vm891 = vcmp.gt.f32.partialorder %v857, 0.0
      %v892 = vmul.f32 %v734, 0.2
      %v893 = vmul.f32 %v737, 0.2
      %v894 = vmul.f32 %v742, 0.2
      %v895 = vmul.f32 %v745, 0.2
      %v896 = vmul.f32 %v750, 0.2
      %v897 = vmul.f32 %v753, 0.2
      %v898 = vmul.f32 %v758, 0.2
      %v899 = vmul.f32 %v761, 0.2
      %v900 = vmul.f32 %v766, 0.2
      %v901 = vmul.f32 %v769, 0.2
      %v902 = vmul.f32 %v774, 0.2
      %v903 = vmul.f32 %v777, 0.2
      %v904 = vmul.f32 %v782, 0.2
      %v905 = vmul.f32 %v785, 0.2
      %v906 = vmul.f32 %v790, 0.2
      %v907 = vmul.f32 %v793, 0.2
      %v908 = vmul.f32 %v798, 0.2
      %v909 = vmul.f32 %v801, 0.2
      %v910 = vmul.f32 %v806, 0.2
      %v911 = vmul.f32 %v809, 0.2
      %v912 = vmul.f32 %v814, 0.2
      %v913 = vmul.f32 %v817, 0.2
      %v914 = vmul.f32 %v822, 0.2
      %v915 = vmul.f32 %v825, 0.2
      %v916 = vmul.f32 %v830, 0.2
      %v917 = vmul.f32 %v833, 0.2
      %v918 = vmul.f32 %v838, 0.2
      %v919 = vmul.f32 %v841, 0.2
      %v920 = vmul.f32 %v846, 0.2
      %v921 = vmul.f32 %v849, 0.2
      %v922 = vmul.f32 %v854, 0.2
      %v923 = vmul.f32 %v857, 0.2
      %v924 = vsel %vm860, %v734, %v892
      %v925 = vsel %vm861, %v737, %v893
      %v926 = vsel %vm862, %v742, %v894
      %v927 = vsel %vm863, %v745, %v895
      %v928 = vsel %vm864, %v750, %v896
      %v929 = vsel %vm865, %v753, %v897
      %v930 = vsel %vm866, %v758, %v898
      %v931 = vsel %vm867, %v761, %v899
      %v932 = vsel %vm868, %v766, %v900
      %v933 = vsel %vm869, %v769, %v901
      %v934 = vsel %vm870, %v774, %v902
      %v935 = vsel %vm871, %v777, %v903
      %v936 = vsel %vm872, %v782, %v904
      %v937 = vsel %vm873, %v785, %v905
      %v938 = vsel %vm874, %v790, %v906
      %v939 = vsel %vm875, %v793, %v907
      %v940 = vsel %vm876, %v798, %v908
      %v941 = vsel %vm877, %v801, %v909
      %v942 = vsel %vm878, %v806, %v910
      %v943 = vsel %vm879, %v809, %v911
      %v944 = vsel %vm880, %v814, %v912
      %v945 = vsel %vm881, %v817, %v913
      %v946 = vsel %vm882, %v822, %v914
      %v947 = vsel %vm883, %v825, %v915
      %v948 = vsel %vm884, %v830, %v916
      %v949 = vsel %vm885, %v833, %v917
      %v950 = vsel %vm886, %v838, %v918
      %v951 = vsel %vm887, %v841, %v919
      %v952 = vsel %vm888, %v846, %v920
      %v953 = vsel %vm889, %v849, %v921
      %v954 = vsel %vm890, %v854, %v922
      %v955 = vsel %vm891, %v857, %v923
      %v956 = vpack.c.bf16 %v925, %v924
      %v957 = vpack.c.bf16 %v927, %v926
      %v958 = vpack.c.bf16 %v929, %v928
      %v959 = vpack.c.bf16 %v931, %v930
      %v960 = vpack.c.bf16 %v933, %v932
      %v961 = vpack.c.bf16 %v935, %v934
      %v962 = vpack.c.bf16 %v937, %v936
      %v963 = vpack.c.bf16 %v939, %v938
      %v964 = vpack.c.bf16 %v941, %v940
      %v965 = vpack.c.bf16 %v943, %v942
      %v966 = vpack.c.bf16 %v945, %v944
      %v967 = vpack.c.bf16 %v947, %v946
      %v968 = vpack.c.bf16 %v949, %v948
      %v969 = vpack.c.bf16 %v951, %v950
      %v970 = vpack.c.bf16 %v953, %v952
      %v971 = vpack.c.bf16 %v955, %v954
      %v972 = vld [vmem:[%s1 + $0x80] sm:$0xf]
      %v973 = vld [vmem:[%s1 + $0x84] sm:$0xf]
      %v974 = vld [vmem:[%s1 + $0x88] sm:$0xf]
      %v975 = vld [vmem:[%s1 + $0x8c] sm:$0xf]
      %v976 = vld [vmem:[%s1 + $0x90] sm:$0xf]
      %v977 = vld [vmem:[%s1 + $0x94] sm:$0xf]
      %v978 = vld [vmem:[%s1 + $0x98] sm:$0xf]
      %v979 = vld [vmem:[%s1 + $0x9c] sm:$0xf]
      %v980 = vld [vmem:[%s1 + $0xa0] sm:$0xf]
      %v981 = vld [vmem:[%s1 + $0xa4] sm:$0xf]
      %v982 = vld [vmem:[%s1 + $0xa8] sm:$0xf]
      %v983 = vld [vmem:[%s1 + $0xac] sm:$0xf]
      %v984 = vld [vmem:[%s1 + $0xb0] sm:$0xf]
      %v985 = vld [vmem:[%s1 + $0xb4] sm:$0xf]
      %v986 = vld [vmem:[%s1 + $0xb8] sm:$0xf]
      %v987 = vld [vmem:[%s1 + $0xbc] sm:$0xf]
      %v988 = vld [vmem:[%s2 + $0x2] sm:$0x1]
      %v989 = vlaneseq
      %v990 = vshrl.u32 %v989, 7
      %v991 = vsub.s32 0, %v990
      %v992 = vrot.slane %v988, %v991
      %v1009 = vunpack.c.l.b16 %v972
      %v1010 = vunpack.c.l.b16 %v973
      %v1011 = vunpack.c.l.b16 %v974
      %v1012 = vunpack.c.l.b16 %v975
      %v1013 = vunpack.c.l.b16 %v976
      %v1014 = vunpack.c.l.b16 %v977
      %v1015 = vunpack.c.l.b16 %v978
      %v1016 = vunpack.c.l.b16 %v979
      %v1017 = vunpack.c.l.b16 %v980
      %v1018 = vunpack.c.l.b16 %v981
      %v1019 = vunpack.c.l.b16 %v982
      %v1020 = vunpack.c.l.b16 %v983
      %v1021 = vunpack.c.l.b16 %v984
      %v1022 = vunpack.c.l.b16 %v985
      %v1023 = vunpack.c.l.b16 %v986
      %v1024 = vunpack.c.l.b16 %v987
      %v1025 = vpack.c.b16 %v1010, %v1009
      %v1026 = vpack.c.b16 %v1012, %v1011
      %v1027 = vpack.c.b16 %v1014, %v1013
      %v1028 = vpack.c.b16 %v1016, %v1015
      %v1029 = vpack.c.b16 %v1018, %v1017
      %v1030 = vpack.c.b16 %v1020, %v1019
      %v1031 = vpack.c.b16 %v1022, %v1021
      %v1032 = vpack.c.b16 %v1024, %v1023
      %1041 = vmatprep.subr.bf16.mxu0 0
      %1042 = vmatpush1.bf16.msra.mxu0 %v1032
      %1043 = vmatprep.subr.bf16.mxu0 0
      %1044 = vmatpush1.bf16.msra.mxu0 %v1031
      %1045 = vmatprep.subr.bf16.mxu0 0
      %1046 = vmatpush1.bf16.msra.mxu0 %v1030
      %1047 = vmatprep.subr.bf16.mxu0 0
      %1048 = vmatpush1.bf16.msra.mxu0 %v1029
      %1049 = vmatprep.subr.bf16.mxu0 0
      %1050 = vmatpush1.bf16.msra.mxu0 %v1028
      %1051 = vmatprep.subr.bf16.mxu0 0
      %1052 = vmatpush1.bf16.msra.mxu0 %v1027
      %1053 = vmatprep.subr.bf16.mxu0 0
      %1054 = vmatpush1.bf16.msra.mxu0 %v1026
      %1055 = vmatprep.subr.bf16.mxu0 0
      %1056 = vmatpush1.bf16.msra.mxu0 %v1025
      %1057 = vmatprep.subr.bf16.mxu0 0
      %1058 = vmatpush2.bf16.msra.mxu0 0
      %1059 = vmatprep.subr.bf16.mxu0 0
      %1060 = vmatpush2.bf16.msra.mxu0 0
      %1061 = vmatprep.subr.bf16.mxu0 0
      %1062 = vmatpush2.bf16.msra.mxu0 0
      %1063 = vmatprep.subr.bf16.mxu0 0
      %1064 = vmatpush2.bf16.msra.mxu0 0
      %1065 = vmatprep.subr.bf16.mxu0 0
      %1066 = vmatpush2.bf16.msra.mxu0 0
      %1067 = vmatprep.subr.bf16.mxu0 0
      %1068 = vmatpush2.bf16.msra.mxu0 0
      %1069 = vmatprep.subr.bf16.mxu0 0
      %1070 = vmatpush2.bf16.msra.mxu0 0
      %1071 = vmatprep.subr.bf16.mxu0 0
      %1072 = vmatpush2.bf16.msra.mxu0 0
      %1073 = vmatprep.mubr.bf16.mxu0 0
      %1074 = vmatmul.mubr.bf16.gmra.mxu0 %v956
      %v1075 = vpop.f32.mrf.mxu0
      %v1076 = vadd.f32 %v992, %v1075
      %v1077 = vpop.f32.mrf.mxu0
      %v1078 = vpop.f32.mrf.mxu0
      %v1079 = vadd.f32 %v992, %v1078
      %v1080 = vpop.f32.mrf.mxu0
      %1081 = vmatprep.mubr.bf16.mxu0 0
      %1082 = vmatmul.mubr.bf16.gmra.mxu0 %v957
      %v1083 = vpop.f32.mrf.mxu0
      %v1084 = vadd.f32 %v992, %v1083
      %v1085 = vpop.f32.mrf.mxu0
      %v1086 = vpop.f32.mrf.mxu0
      %v1087 = vadd.f32 %v992, %v1086
      %v1088 = vpop.f32.mrf.mxu0
      %1089 = vmatprep.mubr.bf16.mxu0 0
      %1090 = vmatmul.mubr.bf16.gmra.mxu0 %v958
      %v1091 = vpop.f32.mrf.mxu0
      %v1092 = vadd.f32 %v992, %v1091
      %v1093 = vpop.f32.mrf.mxu0
      %v1094 = vpop.f32.mrf.mxu0
      %v1095 = vadd.f32 %v992, %v1094
      %v1096 = vpop.f32.mrf.mxu0
      %1097 = vmatprep.mubr.bf16.mxu0 0
      %1098 = vmatmul.mubr.bf16.gmra.mxu0 %v959
      %v1099 = vpop.f32.mrf.mxu0
      %v1100 = vadd.f32 %v992, %v1099
      %v1101 = vpop.f32.mrf.mxu0
      %v1102 = vpop.f32.mrf.mxu0
      %v1103 = vadd.f32 %v992, %v1102
      %v1104 = vpop.f32.mrf.mxu0
      %1105 = vmatprep.mubr.bf16.mxu0 0
      %1106 = vmatmul.mubr.bf16.gmra.mxu0 %v960
      %v1107 = vpop.f32.mrf.mxu0
      %v1108 = vadd.f32 %v992, %v1107
      %v1109 = vpop.f32.mrf.mxu0
      %v1110 = vpop.f32.mrf.mxu0
      %v1111 = vadd.f32 %v992, %v1110
      %v1112 = vpop.f32.mrf.mxu0
      %1113 = vmatprep.mubr.bf16.mxu0 0
      %1114 = vmatmul.mubr.bf16.gmra.mxu0 %v961
      %v1115 = vpop.f32.mrf.mxu0
      %v1116 = vadd.f32 %v992, %v1115
      %v1117 = vpop.f32.mrf.mxu0
      %v1118 = vpop.f32.mrf.mxu0
      %v1119 = vadd.f32 %v992, %v1118
      %v1120 = vpop.f32.mrf.mxu0
      %1121 = vmatprep.mubr.bf16.mxu0 0
      %1122 = vmatmul.mubr.bf16.gmra.mxu0 %v962
      %v1123 = vpop.f32.mrf.mxu0
      %v1124 = vadd.f32 %v992, %v1123
      %v1125 = vpop.f32.mrf.mxu0
      %v1126 = vpop.f32.mrf.mxu0
      %v1127 = vadd.f32 %v992, %v1126
      %v1128 = vpop.f32.mrf.mxu0
      %1129 = vmatprep.mubr.bf16.mxu0 0
      %1130 = vmatmul.mubr.bf16.gmra.mxu0 %v963
      %v1131 = vpop.f32.mrf.mxu0
      %v1132 = vadd.f32 %v992, %v1131
      %v1133 = vpop.f32.mrf.mxu0
      %v1134 = vpop.f32.mrf.mxu0
      %v1135 = vadd.f32 %v992, %v1134
      %v1136 = vpop.f32.mrf.mxu0
      %1137 = vmatprep.mubr.bf16.mxu0 0
      %1138 = vmatmul.mubr.bf16.gmra.mxu0 %v964
      %v1139 = vpop.f32.mrf.mxu0
      %v1140 = vadd.f32 %v992, %v1139
      %v1141 = vpop.f32.mrf.mxu0
      %v1142 = vpop.f32.mrf.mxu0
      %v1143 = vadd.f32 %v992, %v1142
      %v1144 = vpop.f32.mrf.mxu0
      %1145 = vmatprep.mubr.bf16.mxu0 0
      %1146 = vmatmul.mubr.bf16.gmra.mxu0 %v965
      %v1147 = vpop.f32.mrf.mxu0
      %v1148 = vadd.f32 %v992, %v1147
      %v1149 = vpop.f32.mrf.mxu0
      %v1150 = vpop.f32.mrf.mxu0
      %v1151 = vadd.f32 %v992, %v1150
      %v1152 = vpop.f32.mrf.mxu0
      %1153 = vmatprep.mubr.bf16.mxu0 0
      %1154 = vmatmul.mubr.bf16.gmra.mxu0 %v966
      %v1155 = vpop.f32.mrf.mxu0
      %v1156 = vadd.f32 %v992, %v1155
      %v1157 = vpop.f32.mrf.mxu0
      %v1158 = vpop.f32.mrf.mxu0
      %v1159 = vadd.f32 %v992, %v1158
      %v1160 = vpop.f32.mrf.mxu0
      %1161 = vmatprep.mubr.bf16.mxu0 0
      %1162 = vmatmul.mubr.bf16.gmra.mxu0 %v967
      %v1163 = vpop.f32.mrf.mxu0
      %v1164 = vadd.f32 %v992, %v1163
      %v1165 = vpop.f32.mrf.mxu0
      %v1166 = vpop.f32.mrf.mxu0
      %v1167 = vadd.f32 %v992, %v1166
      %v1168 = vpop.f32.mrf.mxu0
      %1169 = vmatprep.mubr.bf16.mxu0 0
      %1170 = vmatmul.mubr.bf16.gmra.mxu0 %v968
      %v1171 = vpop.f32.mrf.mxu0
      %v1172 = vadd.f32 %v992, %v1171
      %v1173 = vpop.f32.mrf.mxu0
      %v1174 = vpop.f32.mrf.mxu0
      %v1175 = vadd.f32 %v992, %v1174
      %v1176 = vpop.f32.mrf.mxu0
      %1177 = vmatprep.mubr.bf16.mxu0 0
      %1178 = vmatmul.mubr.bf16.gmra.mxu0 %v969
      %v1179 = vpop.f32.mrf.mxu0
      %v1180 = vadd.f32 %v992, %v1179
      %v1181 = vpop.f32.mrf.mxu0
      %v1182 = vpop.f32.mrf.mxu0
      %v1183 = vadd.f32 %v992, %v1182
      %v1184 = vpop.f32.mrf.mxu0
      %1185 = vmatprep.mubr.bf16.mxu0 0
      %1186 = vmatmul.mubr.bf16.gmra.mxu0 %v970
      %v1187 = vpop.f32.mrf.mxu0
      %v1188 = vadd.f32 %v992, %v1187
      %v1189 = vpop.f32.mrf.mxu0
      %v1190 = vpop.f32.mrf.mxu0
      %v1191 = vadd.f32 %v992, %v1190
      %v1192 = vpop.f32.mrf.mxu0
      %1193 = vmatprep.mubr.bf16.mxu0 0
      %1194 = vmatmul.mubr.bf16.gmra.mxu0 %v971
      %v1195 = vpop.f32.mrf.mxu0
      %v1196 = vadd.f32 %v992, %v1195
      %v1197 = vpop.f32.mrf.mxu0
      %v1198 = vpop.f32.mrf.mxu0
      %v1199 = vadd.f32 %v992, %v1198
      %v1200 = vpop.f32.mrf.mxu0
      %1201 = vdwg.mxu0
      %vm1202 = vcmp.gt.f32.partialorder %v1076, 0.0
      %vm1203 = vcmp.gt.f32.partialorder %v1079, 0.0
      %vm1204 = vcmp.gt.f32.partialorder %v1084, 0.0
      %vm1205 = vcmp.gt.f32.partialorder %v1087, 0.0
      %vm1206 = vcmp.gt.f32.partialorder %v1092, 0.0
      %vm1207 = vcmp.gt.f32.partialorder %v1095, 0.0
      %vm1208 = vcmp.gt.f32.partialorder %v1100, 0.0
      %vm1209 = vcmp.gt.f32.partialorder %v1103, 0.0
      %vm1210 = vcmp.gt.f32.partialorder %v1108, 0.0
      %vm1211 = vcmp.gt.f32.partialorder %v1111, 0.0
      %vm1212 = vcmp.gt.f32.partialorder %v1116, 0.0
      %vm1213 = vcmp.gt.f32.partialorder %v1119, 0.0
      %vm1214 = vcmp.gt.f32.partialorder %v1124, 0.0
      %vm1215 = vcmp.gt.f32.partialorder %v1127, 0.0
      %vm1216 = vcmp.gt.f32.partialorder %v1132, 0.0
      %vm1217 = vcmp.gt.f32.partialorder %v1135, 0.0
      %vm1218 = vcmp.gt.f32.partialorder %v1140, 0.0
      %vm1219 = vcmp.gt.f32.partialorder %v1143, 0.0
      %vm1220 = vcmp.gt.f32.partialorder %v1148, 0.0
      %vm1221 = vcmp.gt.f32.partialorder %v1151, 0.0
      %vm1222 = vcmp.gt.f32.partialorder %v1156, 0.0
      %vm1223 = vcmp.gt.f32.partialorder %v1159, 0.0
      %vm1224 = vcmp.gt.f32.partialorder %v1164, 0.0
      %vm1225 = vcmp.gt.f32.partialorder %v1167, 0.0
      %vm1226 = vcmp.gt.f32.partialorder %v1172, 0.0
      %vm1227 = vcmp.gt.f32.partialorder %v1175, 0.0
      %vm1228 = vcmp.gt.f32.partialorder %v1180, 0.0
      %vm1229 = vcmp.gt.f32.partialorder %v1183, 0.0
      %vm1230 = vcmp.gt.f32.partialorder %v1188, 0.0
      %vm1231 = vcmp.gt.f32.partialorder %v1191, 0.0
      %vm1232 = vcmp.gt.f32.partialorder %v1196, 0.0
      %vm1233 = vcmp.gt.f32.partialorder %v1199, 0.0
      %v1234 = vmul.f32 %v1076, 0.2
      %v1235 = vmul.f32 %v1079, 0.2
      %v1236 = vmul.f32 %v1084, 0.2
      %v1237 = vmul.f32 %v1087, 0.2
      %v1238 = vmul.f32 %v1092, 0.2
      %v1239 = vmul.f32 %v1095, 0.2
      %v1240 = vmul.f32 %v1100, 0.2
      %v1241 = vmul.f32 %v1103, 0.2
      %v1242 = vmul.f32 %v1108, 0.2
      %v1243 = vmul.f32 %v1111, 0.2
      %v1244 = vmul.f32 %v1116, 0.2
      %v1245 = vmul.f32 %v1119, 0.2
      %v1246 = vmul.f32 %v1124, 0.2
      %v1247 = vmul.f32 %v1127, 0.2
      %v1248 = vmul.f32 %v1132, 0.2
      %v1249 = vmul.f32 %v1135, 0.2
      %v1250 = vmul.f32 %v1140, 0.2
      %v1251 = vmul.f32 %v1143, 0.2
      %v1252 = vmul.f32 %v1148, 0.2
      %v1253 = vmul.f32 %v1151, 0.2
      %v1254 = vmul.f32 %v1156, 0.2
      %v1255 = vmul.f32 %v1159, 0.2
      %v1256 = vmul.f32 %v1164, 0.2
      %v1257 = vmul.f32 %v1167, 0.2
      %v1258 = vmul.f32 %v1172, 0.2
      %v1259 = vmul.f32 %v1175, 0.2
      %v1260 = vmul.f32 %v1180, 0.2
      %v1261 = vmul.f32 %v1183, 0.2
      %v1262 = vmul.f32 %v1188, 0.2
      %v1263 = vmul.f32 %v1191, 0.2
      %v1264 = vmul.f32 %v1196, 0.2
      %v1265 = vmul.f32 %v1199, 0.2
      %v1266 = vsel %vm1202, %v1076, %v1234
      %v1267 = vsel %vm1203, %v1079, %v1235
      %v1268 = vsel %vm1204, %v1084, %v1236
      %v1269 = vsel %vm1205, %v1087, %v1237
      %v1270 = vsel %vm1206, %v1092, %v1238
      %v1271 = vsel %vm1207, %v1095, %v1239
      %v1272 = vsel %vm1208, %v1100, %v1240
      %v1273 = vsel %vm1209, %v1103, %v1241
      %v1274 = vsel %vm1210, %v1108, %v1242
      %v1275 = vsel %vm1211, %v1111, %v1243
      %v1276 = vsel %vm1212, %v1116, %v1244
      %v1277 = vsel %vm1213, %v1119, %v1245
      %v1278 = vsel %vm1214, %v1124, %v1246
      %v1279 = vsel %vm1215, %v1127, %v1247
      %v1280 = vsel %vm1216, %v1132, %v1248
      %v1281 = vsel %vm1217, %v1135, %v1249
      %v1282 = vsel %vm1218, %v1140, %v1250
      %v1283 = vsel %vm1219, %v1143, %v1251
      %v1284 = vsel %vm1220, %v1148, %v1252
      %v1285 = vsel %vm1221, %v1151, %v1253
      %v1286 = vsel %vm1222, %v1156, %v1254
      %v1287 = vsel %vm1223, %v1159, %v1255
      %v1288 = vsel %vm1224, %v1164, %v1256
      %v1289 = vsel %vm1225, %v1167, %v1257
      %v1290 = vsel %vm1226, %v1172, %v1258
      %v1291 = vsel %vm1227, %v1175, %v1259
      %v1292 = vsel %vm1228, %v1180, %v1260
      %v1293 = vsel %vm1229, %v1183, %v1261
      %v1294 = vsel %vm1230, %v1188, %v1262
      %v1295 = vsel %vm1231, %v1191, %v1263
      %v1296 = vsel %vm1232, %v1196, %v1264
      %v1297 = vsel %vm1233, %v1199, %v1265
      %v1298 = vpack.c.bf16 %v1267, %v1266
      %v1299 = vpack.c.bf16 %v1269, %v1268
      %v1300 = vpack.c.bf16 %v1271, %v1270
      %v1301 = vpack.c.bf16 %v1273, %v1272
      %v1302 = vpack.c.bf16 %v1275, %v1274
      %v1303 = vpack.c.bf16 %v1277, %v1276
      %v1304 = vpack.c.bf16 %v1279, %v1278
      %v1305 = vpack.c.bf16 %v1281, %v1280
      %v1306 = vpack.c.bf16 %v1283, %v1282
      %v1307 = vpack.c.bf16 %v1285, %v1284
      %v1308 = vpack.c.bf16 %v1287, %v1286
      %v1309 = vpack.c.bf16 %v1289, %v1288
      %v1310 = vpack.c.bf16 %v1291, %v1290
      %v1311 = vpack.c.bf16 %v1293, %v1292
      %v1312 = vpack.c.bf16 %v1295, %v1294
      %v1313 = vpack.c.bf16 %v1297, %v1296
      %v1314 = vld [vmem:[%s1 + $0xc0] sm:$0xf]
      %v1315 = vld [vmem:[%s1 + $0xc4] sm:$0xf]
      %v1316 = vld [vmem:[%s1 + $0xc8] sm:$0xf]
      %v1317 = vld [vmem:[%s1 + $0xcc] sm:$0xf]
      %v1318 = vld [vmem:[%s1 + $0xd0] sm:$0xf]
      %v1319 = vld [vmem:[%s1 + $0xd4] sm:$0xf]
      %v1320 = vld [vmem:[%s1 + $0xd8] sm:$0xf]
      %v1321 = vld [vmem:[%s1 + $0xdc] sm:$0xf]
      %v1322 = vld [vmem:[%s1 + $0xe0] sm:$0xf]
      %v1323 = vld [vmem:[%s1 + $0xe4] sm:$0xf]
      %v1324 = vld [vmem:[%s1 + $0xe8] sm:$0xf]
      %v1325 = vld [vmem:[%s1 + $0xec] sm:$0xf]
      %v1326 = vld [vmem:[%s1 + $0xf0] sm:$0xf]
      %v1327 = vld [vmem:[%s1 + $0xf4] sm:$0xf]
      %v1328 = vld [vmem:[%s1 + $0xf8] sm:$0xf]
      %v1329 = vld [vmem:[%s1 + $0xfc] sm:$0xf]
      %v1330 = vld [vmem:[%s2 + $0x3] sm:$0x1]
      %v1331 = vlaneseq
      %v1332 = vshrl.u32 %v1331, 7
      %v1333 = vsub.s32 0, %v1332
      %v1334 = vrot.slane %v1330, %v1333
      %v1351 = vunpack.c.l.b16 %v1314
      %v1352 = vunpack.c.l.b16 %v1315
      %v1353 = vunpack.c.l.b16 %v1316
      %v1354 = vunpack.c.l.b16 %v1317
      %v1355 = vunpack.c.l.b16 %v1318
      %v1356 = vunpack.c.l.b16 %v1319
      %v1357 = vunpack.c.l.b16 %v1320
      %v1358 = vunpack.c.l.b16 %v1321
      %v1359 = vunpack.c.l.b16 %v1322
      %v1360 = vunpack.c.l.b16 %v1323
      %v1361 = vunpack.c.l.b16 %v1324
      %v1362 = vunpack.c.l.b16 %v1325
      %v1363 = vunpack.c.l.b16 %v1326
      %v1364 = vunpack.c.l.b16 %v1327
      %v1365 = vunpack.c.l.b16 %v1328
      %v1366 = vunpack.c.l.b16 %v1329
      %v1367 = vpack.c.b16 %v1352, %v1351
      %v1368 = vpack.c.b16 %v1354, %v1353
      %v1369 = vpack.c.b16 %v1356, %v1355
      %v1370 = vpack.c.b16 %v1358, %v1357
      %v1371 = vpack.c.b16 %v1360, %v1359
      %v1372 = vpack.c.b16 %v1362, %v1361
      %v1373 = vpack.c.b16 %v1364, %v1363
      %v1374 = vpack.c.b16 %v1366, %v1365
      %1383 = vmatprep.subr.bf16.mxu0 0
      %1384 = vmatpush1.bf16.msra.mxu0 %v1374
      %1385 = vmatprep.subr.bf16.mxu0 0
      %1386 = vmatpush1.bf16.msra.mxu0 %v1373
      %1387 = vmatprep.subr.bf16.mxu0 0
      %1388 = vmatpush1.bf16.msra.mxu0 %v1372
      %1389 = vmatprep.subr.bf16.mxu0 0
      %1390 = vmatpush1.bf16.msra.mxu0 %v1371
      %1391 = vmatprep.subr.bf16.mxu0 0
      %1392 = vmatpush1.bf16.msra.mxu0 %v1370
      %1393 = vmatprep.subr.bf16.mxu0 0
      %1394 = vmatpush1.bf16.msra.mxu0 %v1369
      %1395 = vmatprep.subr.bf16.mxu0 0
      %1396 = vmatpush1.bf16.msra.mxu0 %v1368
      %1397 = vmatprep.subr.bf16.mxu0 0
      %1398 = vmatpush1.bf16.msra.mxu0 %v1367
      %1399 = vmatprep.subr.bf16.mxu0 0
      %1400 = vmatpush2.bf16.msra.mxu0 0
      %1401 = vmatprep.subr.bf16.mxu0 0
      %1402 = vmatpush2.bf16.msra.mxu0 0
      %1403 = vmatprep.subr.bf16.mxu0 0
      %1404 = vmatpush2.bf16.msra.mxu0 0
      %1405 = vmatprep.subr.bf16.mxu0 0
      %1406 = vmatpush2.bf16.msra.mxu0 0
      %1407 = vmatprep.subr.bf16.mxu0 0
      %1408 = vmatpush2.bf16.msra.mxu0 0
      %1409 = vmatprep.subr.bf16.mxu0 0
      %1410 = vmatpush2.bf16.msra.mxu0 0
      %1411 = vmatprep.subr.bf16.mxu0 0
      %1412 = vmatpush2.bf16.msra.mxu0 0
      %1413 = vmatprep.subr.bf16.mxu0 0
      %1414 = vmatpush2.bf16.msra.mxu0 0
      %1415 = vmatprep.mubr.bf16.mxu0 0
      %1416 = vmatmul.mubr.bf16.gmra.mxu0 %v1298
      %v1417 = vpop.f32.mrf.mxu0
      %v1418 = vadd.f32 %v1334, %v1417
      %v1419 = vpop.f32.mrf.mxu0
      %v1420 = vpop.f32.mrf.mxu0
      %v1421 = vadd.f32 %v1334, %v1420
      %v1422 = vpop.f32.mrf.mxu0
      %1423 = vmatprep.mubr.bf16.mxu0 0
      %1424 = vmatmul.mubr.bf16.gmra.mxu0 %v1299
      %v1425 = vpop.f32.mrf.mxu0
      %v1426 = vadd.f32 %v1334, %v1425
      %v1427 = vpop.f32.mrf.mxu0
      %v1428 = vpop.f32.mrf.mxu0
      %v1429 = vadd.f32 %v1334, %v1428
      %v1430 = vpop.f32.mrf.mxu0
      %1431 = vmatprep.mubr.bf16.mxu0 0
      %1432 = vmatmul.mubr.bf16.gmra.mxu0 %v1300
      %v1433 = vpop.f32.mrf.mxu0
      %v1434 = vadd.f32 %v1334, %v1433
      %v1435 = vpop.f32.mrf.mxu0
      %v1436 = vpop.f32.mrf.mxu0
      %v1437 = vadd.f32 %v1334, %v1436
      %v1438 = vpop.f32.mrf.mxu0
      %1439 = vmatprep.mubr.bf16.mxu0 0
      %1440 = vmatmul.mubr.bf16.gmra.mxu0 %v1301
      %v1441 = vpop.f32.mrf.mxu0
      %v1442 = vadd.f32 %v1334, %v1441
      %v1443 = vpop.f32.mrf.mxu0
      %v1444 = vpop.f32.mrf.mxu0
      %v1445 = vadd.f32 %v1334, %v1444
      %v1446 = vpop.f32.mrf.mxu0
      %1447 = vmatprep.mubr.bf16.mxu0 0
      %1448 = vmatmul.mubr.bf16.gmra.mxu0 %v1302
      %v1449 = vpop.f32.mrf.mxu0
      %v1450 = vadd.f32 %v1334, %v1449
      %v1451 = vpop.f32.mrf.mxu0
      %v1452 = vpop.f32.mrf.mxu0
      %v1453 = vadd.f32 %v1334, %v1452
      %v1454 = vpop.f32.mrf.mxu0
      %1455 = vmatprep.mubr.bf16.mxu0 0
      %1456 = vmatmul.mubr.bf16.gmra.mxu0 %v1303
      %v1457 = vpop.f32.mrf.mxu0
      %v1458 = vadd.f32 %v1334, %v1457
      %v1459 = vpop.f32.mrf.mxu0
      %v1460 = vpop.f32.mrf.mxu0
      %v1461 = vadd.f32 %v1334, %v1460
      %v1462 = vpop.f32.mrf.mxu0
      %1463 = vmatprep.mubr.bf16.mxu0 0
      %1464 = vmatmul.mubr.bf16.gmra.mxu0 %v1304
      %v1465 = vpop.f32.mrf.mxu0
      %v1466 = vadd.f32 %v1334, %v1465
      %v1467 = vpop.f32.mrf.mxu0
      %v1468 = vpop.f32.mrf.mxu0
      %v1469 = vadd.f32 %v1334, %v1468
      %v1470 = vpop.f32.mrf.mxu0
      %1471 = vmatprep.mubr.bf16.mxu0 0
      %1472 = vmatmul.mubr.bf16.gmra.mxu0 %v1305
      %v1473 = vpop.f32.mrf.mxu0
      %v1474 = vadd.f32 %v1334, %v1473
      %v1475 = vpop.f32.mrf.mxu0
      %v1476 = vpop.f32.mrf.mxu0
      %v1477 = vadd.f32 %v1334, %v1476
      %v1478 = vpop.f32.mrf.mxu0
      %1479 = vmatprep.mubr.bf16.mxu0 0
      %1480 = vmatmul.mubr.bf16.gmra.mxu0 %v1306
      %v1481 = vpop.f32.mrf.mxu0
      %v1482 = vadd.f32 %v1334, %v1481
      %v1483 = vpop.f32.mrf.mxu0
      %v1484 = vpop.f32.mrf.mxu0
      %v1485 = vadd.f32 %v1334, %v1484
      %v1486 = vpop.f32.mrf.mxu0
      %1487 = vmatprep.mubr.bf16.mxu0 0
      %1488 = vmatmul.mubr.bf16.gmra.mxu0 %v1307
      %v1489 = vpop.f32.mrf.mxu0
      %v1490 = vadd.f32 %v1334, %v1489
      %v1491 = vpop.f32.mrf.mxu0
      %v1492 = vpop.f32.mrf.mxu0
      %v1493 = vadd.f32 %v1334, %v1492
      %v1494 = vpop.f32.mrf.mxu0
      %1495 = vmatprep.mubr.bf16.mxu0 0
      %1496 = vmatmul.mubr.bf16.gmra.mxu0 %v1308
      %v1497 = vpop.f32.mrf.mxu0
      %v1498 = vadd.f32 %v1334, %v1497
      %v1499 = vpop.f32.mrf.mxu0
      %v1500 = vpop.f32.mrf.mxu0
      %v1501 = vadd.f32 %v1334, %v1500
      %v1502 = vpop.f32.mrf.mxu0
      %1503 = vmatprep.mubr.bf16.mxu0 0
      %1504 = vmatmul.mubr.bf16.gmra.mxu0 %v1309
      %v1505 = vpop.f32.mrf.mxu0
      %v1506 = vadd.f32 %v1334, %v1505
      %v1507 = vpop.f32.mrf.mxu0
      %v1508 = vpop.f32.mrf.mxu0
      %v1509 = vadd.f32 %v1334, %v1508
      %v1510 = vpop.f32.mrf.mxu0
      %1511 = vmatprep.mubr.bf16.mxu0 0
      %1512 = vmatmul.mubr.bf16.gmra.mxu0 %v1310
      %v1513 = vpop.f32.mrf.mxu0
      %v1514 = vadd.f32 %v1334, %v1513
      %v1515 = vpop.f32.mrf.mxu0
      %v1516 = vpop.f32.mrf.mxu0
      %v1517 = vadd.f32 %v1334, %v1516
      %v1518 = vpop.f32.mrf.mxu0
      %1519 = vmatprep.mubr.bf16.mxu0 0
      %1520 = vmatmul.mubr.bf16.gmra.mxu0 %v1311
      %v1521 = vpop.f32.mrf.mxu0
      %v1522 = vadd.f32 %v1334, %v1521
      %v1523 = vpop.f32.mrf.mxu0
      %v1524 = vpop.f32.mrf.mxu0
      %v1525 = vadd.f32 %v1334, %v1524
      %v1526 = vpop.f32.mrf.mxu0
      %1527 = vmatprep.mubr.bf16.mxu0 0
      %1528 = vmatmul.mubr.bf16.gmra.mxu0 %v1312
      %v1529 = vpop.f32.mrf.mxu0
      %v1530 = vadd.f32 %v1334, %v1529
      %v1531 = vpop.f32.mrf.mxu0
      %v1532 = vpop.f32.mrf.mxu0
      %v1533 = vadd.f32 %v1334, %v1532
      %v1534 = vpop.f32.mrf.mxu0
      %1535 = vmatprep.mubr.bf16.mxu0 0
      %1536 = vmatmul.mubr.bf16.gmra.mxu0 %v1313
      %v1537 = vpop.f32.mrf.mxu0
      %v1538 = vadd.f32 %v1334, %v1537
      %v1539 = vpop.f32.mrf.mxu0
      %v1540 = vpop.f32.mrf.mxu0
      %v1541 = vadd.f32 %v1334, %v1540
      %v1542 = vpop.f32.mrf.mxu0
      %1543 = vdwg.mxu0
      %v1544 = vtanh.pop %v1418
      %v1545 = vtanh.pop %v1421
      %v1546 = vtanh.pop %v1426
      %v1547 = vtanh.pop %v1429
      %v1548 = vtanh.pop %v1434
      %v1549 = vtanh.pop %v1437
      %v1550 = vtanh.pop %v1442
      %v1551 = vtanh.pop %v1445
      %v1552 = vtanh.pop %v1450
      %v1553 = vtanh.pop %v1453
      %v1554 = vtanh.pop %v1458
      %v1555 = vtanh.pop %v1461
      %v1556 = vtanh.pop %v1466
      %v1557 = vtanh.pop %v1469
      %v1558 = vtanh.pop %v1474
      %v1559 = vtanh.pop %v1477
      %v1560 = vtanh.pop %v1482
      %v1561 = vtanh.pop %v1485
      %v1562 = vtanh.pop %v1490
      %v1563 = vtanh.pop %v1493
      %v1564 = vtanh.pop %v1498
      %v1565 = vtanh.pop %v1501
      %v1566 = vtanh.pop %v1506
      %v1567 = vtanh.pop %v1509
      %v1568 = vtanh.pop %v1514
      %v1569 = vtanh.pop %v1517
      %v1570 = vtanh.pop %v1522
      %v1571 = vtanh.pop %v1525
      %v1572 = vtanh.pop %v1530
      %v1573 = vtanh.pop %v1533
      %v1574 = vtanh.pop %v1538
      %v1575 = vtanh.pop %v1541
      %vm1576 = vcmask 80896
      %1577 = vst.msk [vmem:[%s172] sm:$0xff] %vm1576, %v1544
      %1578 = vst.msk [vmem:[%s172 + $0x8] sm:$0xff] %vm1576, %v1545
      %1579 = vst.msk [vmem:[%s172 + $0x10] sm:$0xff] %vm1576, %v1546
      %1580 = vst.msk [vmem:[%s172 + $0x18] sm:$0xff] %vm1576, %v1547
      %1581 = vst.msk [vmem:[%s172 + $0x20] sm:$0xff] %vm1576, %v1548
      %1582 = vst.msk [vmem:[%s172 + $0x28] sm:$0xff] %vm1576, %v1549
      %1583 = vst.msk [vmem:[%s172 + $0x30] sm:$0xff] %vm1576, %v1550
      %1584 = vst.msk [vmem:[%s172 + $0x38] sm:$0xff] %vm1576, %v1551
      %1585 = vst.msk [vmem:[%s172 + $0x40] sm:$0xff] %vm1576, %v1552
      %1586 = vst.msk [vmem:[%s172 + $0x48] sm:$0xff] %vm1576, %v1553
      %1587 = vst.msk [vmem:[%s172 + $0x50] sm:$0xff] %vm1576, %v1554
      %1588 = vst.msk [vmem:[%s172 + $0x58] sm:$0xff] %vm1576, %v1555
      %1589 = vst.msk [vmem:[%s172 + $0x60] sm:$0xff] %vm1576, %v1556
      %1590 = vst.msk [vmem:[%s172 + $0x68] sm:$0xff] %vm1576, %v1557
      %1591 = vst.msk [vmem:[%s172 + $0x70] sm:$0xff] %vm1576, %v1558
      %1592 = vst.msk [vmem:[%s172 + $0x78] sm:$0xff] %vm1576, %v1559
      %1593 = vst.msk [vmem:[%s172 + $0x80] sm:$0xff] %vm1576, %v1560
      %1594 = vst.msk [vmem:[%s172 + $0x88] sm:$0xff] %vm1576, %v1561
      %1595 = vst.msk [vmem:[%s172 + $0x90] sm:$0xff] %vm1576, %v1562
      %1596 = vst.msk [vmem:[%s172 + $0x98] sm:$0xff] %vm1576, %v1563
      %1597 = vst.msk [vmem:[%s172 + $0xa0] sm:$0xff] %vm1576, %v1564
      %1598 = vst.msk [vmem:[%s172 + $0xa8] sm:$0xff] %vm1576, %v1565
      %1599 = vst.msk [vmem:[%s172 + $0xb0] sm:$0xff] %vm1576, %v1566
      %1600 = vst.msk [vmem:[%s172 + $0xb8] sm:$0xff] %vm1576, %v1567
      %1601 = vst.msk [vmem:[%s172 + $0xc0] sm:$0xff] %vm1576, %v1568
      %1602 = vst.msk [vmem:[%s172 + $0xc8] sm:$0xff] %vm1576, %v1569
      %1603 = vst.msk [vmem:[%s172 + $0xd0] sm:$0xff] %vm1576, %v1570
      %1604 = vst.msk [vmem:[%s172 + $0xd8] sm:$0xff] %vm1576, %v1571
      %1605 = vst.msk [vmem:[%s172 + $0xe0] sm:$0xff] %vm1576, %v1572
      %1606 = vst.msk [vmem:[%s172 + $0xe8] sm:$0xff] %vm1576, %v1573
      %1607 = vst.msk [vmem:[%s172 + $0xf0] sm:$0xff] %vm1576, %v1574
      %1608 = vst.msk [vmem:[%s172 + $0xf8] sm:$0xff] %vm1576, %v1575
      %s1609 = smul.u32 32, %s14
      %p1610 = scmp.lt.s32.totalorder %s1609, 63
      %s1611 = scalar_select %p1610, %s1609, 63
      %s1612 = smul.addr %s1611, 8
      %s1613 = scalar_lea.vmem %s3, %s1612
      // Predicated region
      $region33: #{forward.1} parent=31 // pred_check
        %p1614 = pneg %p100
      $region34: #{forward.1} parent=31 // pred_check_branch
        %1616 = sbr.rel (%p1614) target = $region36
      $region35: #{forward.1} parent=31 // pred_region
        %s1617 = smul.u32 32, %s14
      $region36: #{forward.1} parent=31 // pred_fallthru
        _
    $region32: #{forward.1} parent=5 // pred_fallthru
      _
    %p1618 = scmp.le.s32.totalorder 2, %s9
    // Predicated region
    $region37: #{forward.1} parent=5 // pred_check
      %p1619 = pneg %p1618
    $region38: #{forward.1} parent=5 // pred_check_branch
      %1621 = sbr.rel (%p1619) target = $region40
    $region39: #{forward.1} parent=5 // pred_region
      %s1622 = ssub.s32 %s9, 2
      // Predicated region
      $region41: #{forward.1} parent=39 // pred_check
        %p1623 = pneg %p106
      $region42: #{forward.1} parent=39 // pred_check_branch
        %1625 = sbr.rel (%p1623) target = $region44
      $region43: #{forward.1} parent=39 // pred_region
        %s1626 = smul.u32 32, %s15
        %p1627 = scmp.lt.s32.totalorder %s1626, 63
        %s1628 = scalar_select %p1627, %s1626, 63
        %s1629 = smul.addr %s1628, 8
        %s1630 = scalar_lea.vmem %s3, %s1629
      $region44: #{forward.1} parent=39 // pred_fallthru
        _
    $region40: #{forward.1} parent=5 // pred_fallthru
      _
  $region6: #{forward.1} parent=0 // loop_footer
    %s13 = sadd.s32 1, %s9
  $region7: #{forward.1} parent=0 // loop_footer_branch
    %8 = sbr.rel target = $region3
  $region8: #{forward.1} parent=0 // loop_exit
    _

</llo_original>
